<compile_context>
chip_gen: v5e
topology: v5e:2x2
jax: 0.10.0
libtpu: 0.0.40
codegen_flags: <defaults>
</compile_context>

<pallas_src>
import jax
import jax.numpy as jnp
from jax.experimental import pallas as pl
from jax.experimental.pallas import tpu as pltpu

_BN_EPS = 1e-5
_HIDDEN = 512


def _pick_hw_tile(hw, cap=512):
    """Largest spatial tile <= cap that divides HW (multiple of 8), else HW."""
    if hw <= cap:
        return hw
    t = cap - (cap % 8)
    while t >= 8:
        if hw % t == 0:
            return t
        t -= 8
    # TODO(synk): pad ragged spatial extents with -inf instead of one big block.
    return hw


# ---------------------------------------------------------------------------
# Fused kernel: global max pool (3 feature maps) + folded dense head
# grid = (B tiles, 3 features, spatial tiles)
# ---------------------------------------------------------------------------
def _iqa_fused_kernel(x_ref, w1_ref, b1_ref, w2_ref, b2_ref, o_ref,
                      pool_acc, dense_acc):
    f = pl.program_id(1)
    s = pl.program_id(2)
    n_f = pl.num_programs(1)
    n_s = pl.num_programs(2)

    # ---- global max pool over this spatial tile --------------------------
    # x block: (1, b_tile, hw_tile, C); channels on lanes -> the spatial max is
    # elementwise VPU maxes across sublane groups (no cross-lane XLU reduce).
    tile_max = jnp.max(x_ref[0], axis=1)               # (b_tile, C)

    @pl.when(s == 0)
    def _():
        pool_acc[...] = jnp.full_like(pool_acc, -jnp.inf)

    pool_acc[...] = jnp.maximum(pool_acc[...], tile_max)

    # ---- last spatial tile of feature f: partial matmul accumulation ------
    @pl.when(s == n_s - 1)
    def _():
        @pl.when(f == 0)
        def _():
            dense_acc[...] = jnp.zeros_like(dense_acc)

        dense_acc[...] += jnp.dot(pool_acc[...], w1_ref[0],
                                  preferred_element_type=jnp.float32)

        # ---- epilogue after the last feature ------------------------------
        @pl.when(f == n_f - 1)
        def _():
            # Linear bias + BatchNorm1d(eval) already folded into b1.
            h = jnp.maximum(dense_acc[...] + b1_ref[...], 0.0)     # ReLU
            # Dropout(0.5) is identity in eval mode.
            # Linear(512, 1) as a lane reduction, then Sigmoid.
            q = jnp.sum(h * w2_ref[...], axis=-1, keepdims=True) + b2_ref[...]
            # Lane-padded store; wrapper slices column 0.
            o_ref[...] = jnp.broadcast_to(jax.nn.sigmoid(q), o_ref.shape)


# ---------------------------------------------------------------------------
# Parameter prep (done once, outside the per-call path)
# ---------------------------------------------------------------------------
def init_params(key):
    k1, k2, k3, k4 = jax.random.split(key, 4)
    return {
        "w1": jax.random.normal(k1, (3072, _HIDDEN), jnp.float32) * (1.0 / jnp.sqrt(3072.0)),
        "b1": jax.random.normal(k2, (1, _HIDDEN), jnp.float32) * 0.01,
        "gamma": jnp.ones((1, _HIDDEN), jnp.float32),
        "beta": jnp.zeros((1, _HIDDEN), jnp.float32),
        "mean": jnp.zeros((1, _HIDDEN), jnp.float32),
        "var": jnp.ones((1, _HIDDEN), jnp.float32),
        "w2": jax.random.normal(k3, (1, _HIDDEN), jnp.float32) * (1.0 / jnp.sqrt(512.0)),
        "b2": jax.random.normal(k4, (1, 1), jnp.float32) * 0.01,
    }


def fold_params(params):
    """Fold duplicate-concat + BatchNorm(eval) + bias into the first Linear."""
    w1 = params["w1"]                                   # (3072, 512), (in, out)
    # qft = [a1,a1,a2,a2,a3,a3]: rows r and r+512 of each 1024-row group hit
    # the same pooled feature -> sum them: (3, 512, 512) per-feature K-slices.
    w1 = w1.reshape(3, 2, _HIDDEN, _HIDDEN).sum(axis=1)
    scale = params["gamma"] * jax.lax.rsqrt(params["var"] + _BN_EPS)   # (1,512)
    w1 = w1 * scale[None]                               # scale output columns
    b1 = (params["b1"] - params["mean"]) * scale + params["beta"]
    # NOTE: on v6e, casting w1 / x to bf16 here would halve the weight DMA
    # again; kept f32 for numerical parity with the reference.
    return {"w1f": w1, "b1f": b1, "w2": params["w2"], "b2": params["b2"]}


# ---------------------------------------------------------------------------
# Forward
# ---------------------------------------------------------------------------
def iqa_merge_net_forward(folded, ft1, ft2, ft3):
    B, C, H, W = ft1.shape
    assert ft2.shape == ft1.shape and ft3.shape == ft1.shape, (
        "fused kernel assumes the three feature maps share one shape")
    # TODO(synk): support unequal per-feature channel/spatial sizes (would need
    # per-feature pooling blocks or padding).
    assert 2 * 3 * C == 3072, "qdense expects 2*(C1+C2+C3) == 3072"
    HW = H * W

    # NCHW -> (3, B, HW, C): one fused stack+transpose copy so channels land on
    # the lane axis for the kernel.
    x = jnp.stack([ft1, ft2, ft3]).reshape(3, B, C, HW).transpose(0, 1, 3, 2)

    b_tile = 8 if (B > 8 and B % 8 == 0) else B
    hw_tile = _pick_hw_tile(HW)
    grid = (B // b_tile, 3, HW // hw_tile)

    out = pl.pallas_call(
        _iqa_fused_kernel,
        out_shape=jax.ShapeDtypeStruct((B, 128), jnp.float32),
        grid_spec=pltpu.PrefetchScalarGridSpec(
            num_scalar_prefetch=0,
            grid=grid,
            in_specs=[
                pl.BlockSpec((1, b_tile, hw_tile, C),
                             lambda b, f, s: (f, b, s, 0)),               # feats
                pl.BlockSpec((1, C, _HIDDEN), lambda b, f, s: (f, 0, 0)),  # W1'
                pl.BlockSpec((1, _HIDDEN), lambda b, f, s: (0, 0)),        # b1'
                pl.BlockSpec((1, _HIDDEN), lambda b, f, s: (0, 0)),        # w2
                pl.BlockSpec((1, 1), lambda b, f, s: (0, 0)),              # b2
            ],
            out_specs=pl.BlockSpec((b_tile, 128), lambda b, f, s: (b, 0)),
            scratch_shapes=[
                pltpu.VMEM((b_tile, C), jnp.float32),        # running max
                pltpu.VMEM((b_tile, _HIDDEN), jnp.float32),  # dense accumulator
            ],
        ),
        compiler_params=pltpu.CompilerParams(
            dimension_semantics=("parallel", "arbitrary", "arbitrary")),
    )(x, folded["w1f"], folded["b1f"], folded["w2"], folded["b2"])

    return {"Q": out[:, :1]}


# ---------------------------------------------------------------------------
# Pure-JAX reference of the original (unfolded) module, for a sanity check
# ---------------------------------------------------------------------------
def _reference_forward(params, ft1, ft2, ft3):
    def gmp(t):
        return jnp.max(t.reshape(t.shape[0], t.shape[1], -1), axis=-1)
    a1, a2, a3 = gmp(ft1), gmp(ft2), gmp(ft3)
    qft = jnp.concatenate([a1, a1, a2, a2, a3, a3], axis=1)
    h = jnp.dot(qft, params["w1"], precision=jax.lax.Precision.HIGHEST) + params["b1"]
    scale = params["gamma"] * jax.lax.rsqrt(params["var"] + _BN_EPS)
    h = (h - params["mean"]) * scale + params["beta"]
    h = jnp.maximum(h, 0.0)
    q = jnp.dot(h, params["w2"].T, precision=jax.lax.Precision.HIGHEST) + params["b2"]
    return jax.nn.sigmoid(q)


if __name__ == "__main__":
    key = jax.random.PRNGKey(0)
    kp, k1, k2, k3 = jax.random.split(key, 4)
    params = init_params(kp)
    folded = fold_params(params)          # once, outside the per-call path

    # Small shapes consistent with the module: 2*(C1+C2+C3) must equal 3072,
    # so C1 = C2 = C3 = 512 with an 8x8 spatial extent and batch 2.
    B, C, H, W = 2, 512, 8, 8
    ft1 = jax.random.normal(k1, (B, C, H, W), jnp.float32)
    ft2 = jax.random.normal(k2, (B, C, H, W), jnp.float32)
    ft3 = jax.random.normal(k3, (B, C, H, W), jnp.float32)

    fwd = jax.jit(iqa_merge_net_forward)
    out = fwd(folded, ft1, ft2, ft3)
    q = jax.block_until_ready(out["Q"])
    assert q.shape == (B, 1)

    ref = _reference_forward(params, ft1, ft2, ft3)
    assert bool(jnp.allclose(q, ref, atol=1e-2, rtol=1e-2))
    print("KERNEL_OK")
</pallas_src>

<mosaic_0001>
module attributes {stable_mosaic.version = 11 : i64} {
  func.func @_iqa_fused_kernel(%arg0: i32, %arg1: i32, %arg2: i32, %arg3: memref<1x2x64x512xf32, #tpu.memory_space<vmem>>, %arg4: memref<1x512x512xf32, #tpu.memory_space<vmem>>, %arg5: memref<1x512xf32, #tpu.memory_space<vmem>>, %arg6: memref<1x512xf32, #tpu.memory_space<vmem>>, %arg7: memref<1x1xf32, #tpu.memory_space<vmem>>, %arg8: memref<2x128xf32, #tpu.memory_space<vmem>>, %arg9: memref<2x512xf32, #tpu.memory_space<vmem>>, %arg10: memref<2x512xf32, #tpu.memory_space<vmem>>) attributes {dimension_semantics = [#tpu.dimension_semantics<parallel>, #tpu.dimension_semantics<arbitrary>, #tpu.dimension_semantics<arbitrary>], iteration_bounds = array<i64: 1, 3, 1>, scalar_prefetch = 0 : i64, scratch_operands = 2 : i64, tpu.core_type = #tpu.core_type<tc>, window_params = [{transform_indices = @transform_0, window_bounds = array<i64: 1, 2, 64, 512>}, {transform_indices = @transform_1, window_bounds = array<i64: 1, 512, 512>}, {pipeline_mode = #tpu.pipeline_mode<synchronous>, transform_indices = @transform_2, window_bounds = array<i64: 1, 512>}, {pipeline_mode = #tpu.pipeline_mode<synchronous>, transform_indices = @transform_3, window_bounds = array<i64: 1, 512>}, {pipeline_mode = #tpu.pipeline_mode<synchronous>, transform_indices = @transform_4, window_bounds = array<i64: 1, 1>}, {transform_indices = @transform_5, window_bounds = array<i64: 2, 128>}]} {
    %c0 = arith.constant 0 : index
    %c0_0 = arith.constant 0 : index
    %c0_1 = arith.constant 0 : index
    %c0_2 = arith.constant 0 : index
    %0 = vector.load %arg3[%c0, %c0_0, %c0_1, %c0_2] : memref<1x2x64x512xf32, #tpu.memory_space<vmem>>, vector<1x2x64x512xf32>
    %1 = vector.shape_cast %0 : vector<1x2x64x512xf32> to vector<2x64x512xf32>
    %cst = arith.constant dense<0xFF800000> : vector<2x512xf32>
    %2 = vector.multi_reduction <maximumf>, %1, %cst [1] : vector<2x64x512xf32> to vector<2x512xf32>
    %c0_i32 = arith.constant 0 : i32
    %3 = arith.cmpi eq, %arg2, %c0_i32 : i32
    %4 = arith.extui %3 : i1 to i32
    %c0_i32_3 = arith.constant 0 : i32
    %5 = arith.cmpi ne, %4, %c0_i32_3 : i32
    scf.if %5 {
      %cst_10 = arith.constant 0xFF800000 : f32
      %12 = vector.broadcast %cst_10 : f32 to vector<2x512xf32>
      %c0_11 = arith.constant 0 : index
      %c0_12 = arith.constant 0 : index
      %13 = vector.load %arg9[%c0_11, %c0_12] : memref<2x512xf32, #tpu.memory_space<vmem>>, vector<2x512xf32>
      tpu.vector_store %arg9[%c0_11, %c0_12], %12 {strides = array<i32>} : memref<2x512xf32, #tpu.memory_space<vmem>>, vector<2x512xf32>,
    } else {
    }
    %c0_4 = arith.constant 0 : index
    %c0_5 = arith.constant 0 : index
    %6 = vector.load %arg9[%c0_4, %c0_5] : memref<2x512xf32, #tpu.memory_space<vmem>>, vector<2x512xf32>
    %7 = arith.maximumf %6, %2 : vector<2x512xf32>
    %c0_6 = arith.constant 0 : index
    %c0_7 = arith.constant 0 : index
    %8 = vector.load %arg9[%c0_6, %c0_7] : memref<2x512xf32, #tpu.memory_space<vmem>>, vector<2x512xf32>
    tpu.vector_store %arg9[%c0_6, %c0_7], %7 {strides = array<i32>} : memref<2x512xf32, #tpu.memory_space<vmem>>, vector<2x512xf32>,
    %c0_i32_8 = arith.constant 0 : i32
    %9 = arith.cmpi eq, %arg2, %c0_i32_8 : i32
    %10 = arith.extui %9 : i1 to i32
    %c0_i32_9 = arith.constant 0 : i32
    %11 = arith.cmpi ne, %10, %c0_i32_9 : i32
    scf.if %11 {
      %c0_i32_10 = arith.constant 0 : i32
      %12 = arith.cmpi eq, %arg1, %c0_i32_10 : i32
      %13 = arith.extui %12 : i1 to i32
      %c0_i32_11 = arith.constant 0 : i32
      %14 = arith.cmpi ne, %13, %c0_i32_11 : i32
      scf.if %14 {
        %cst_23 = arith.constant 0.000000e+00 : f32
        %25 = vector.broadcast %cst_23 : f32 to vector<2x512xf32>
        %c0_24 = arith.constant 0 : index
        %c0_25 = arith.constant 0 : index
        %26 = vector.load %arg10[%c0_24, %c0_25] : memref<2x512xf32, #tpu.memory_space<vmem>>, vector<2x512xf32>
        tpu.vector_store %arg10[%c0_24, %c0_25], %25 {strides = array<i32>} : memref<2x512xf32, #tpu.memory_space<vmem>>, vector<2x512xf32>,
      } else {
      }
      %c0_12 = arith.constant 0 : index
      %c0_13 = arith.constant 0 : index
      %15 = vector.load %arg10[%c0_12, %c0_13] : memref<2x512xf32, #tpu.memory_space<vmem>>, vector<2x512xf32>
      %c0_14 = arith.constant 0 : index
      %c0_15 = arith.constant 0 : index
      %16 = vector.load %arg9[%c0_14, %c0_15] : memref<2x512xf32, #tpu.memory_space<vmem>>, vector<2x512xf32>
      %c0_16 = arith.constant 0 : index
      %c0_17 = arith.constant 0 : index
      %c0_18 = arith.constant 0 : index
      %17 = vector.load %arg4[%c0_16, %c0_17, %c0_18] : memref<1x512x512xf32, #tpu.memory_space<vmem>>, vector<1x512x512xf32>
      %18 = vector.shape_cast %17 : vector<1x512x512xf32> to vector<512x512xf32>
      %cst_19 = arith.constant dense<0.000000e+00> : vector<2x512xf32>
      %19 = tpu.matmul %16, %18, %cst_19 {dimension_numbers = #tpu.dot_dimension_numbers<[1], [0], [0], [1], [0, 0, 1, 1], [], []>} : vector<2x512xf32>, vector<512x512xf32>, vector<2x512xf32> -> vector<2x512xf32>
      %20 = arith.addf %15, %19 : vector<2x512xf32>
      %c0_20 = arith.constant 0 : index
      %c0_21 = arith.constant 0 : index
      %21 = vector.load %arg10[%c0_20, %c0_21] : memref<2x512xf32, #tpu.memory_space<vmem>>, vector<2x512xf32>
      tpu.vector_store %arg10[%c0_20, %c0_21], %20 {strides = array<i32>} : memref<2x512xf32, #tpu.memory_space<vmem>>, vector<2x512xf32>,
      %c2_i32 = arith.constant 2 : i32
      %22 = arith.cmpi eq, %arg1, %c2_i32 : i32
      %23 = arith.extui %22 : i1 to i32
      %c0_i32_22 = arith.constant 0 : i32
      %24 = arith.cmpi ne, %23, %c0_i32_22 : i32
      scf.if %24 {
        %c0_23 = arith.constant 0 : index
        %c0_24 = arith.constant 0 : index
        %25 = vector.load %arg10[%c0_23, %c0_24] : memref<2x512xf32, #tpu.memory_space<vmem>>, vector<2x512xf32>
        %c0_25 = arith.constant 0 : index
        %c0_26 = arith.constant 0 : index
        %26 = vector.load %arg5[%c0_25, %c0_26] : memref<1x512xf32, #tpu.memory_space<vmem>>, vector<1x512xf32>
        %27 = vector.broadcast %26 : vector<1x512xf32> to vector<2x512xf32>
        %28 = arith.addf %25, %27 : vector<2x512xf32>
        %cst_27 = arith.constant 0.000000e+00 : f32
        %29 = vector.broadcast %cst_27 : f32 to vector<2x512xf32>
        %30 = arith.maximumf %28, %29 : vector<2x512xf32>
        %c0_28 = arith.constant 0 : index
        %c0_29 = arith.constant 0 : index
        %31 = vector.load %arg6[%c0_28, %c0_29] : memref<1x512xf32, #tpu.memory_space<vmem>>, vector<1x512xf32>
        %32 = vector.broadcast %31 : vector<1x512xf32> to vector<2x512xf32>
        %33 = arith.mulf %30, %32 : vector<2x512xf32>
        %cst_30 = arith.constant dense<0.000000e+00> : vector<2xf32>
        %34 = vector.multi_reduction <add>, %33, %cst_30 [1] : vector<2x512xf32> to vector<2xf32>
        %35 = vector.shape_cast %34 : vector<2xf32> to vector<2x1xf32>
        %c0_31 = arith.constant 0 : index
        %c0_32 = arith.constant 0 : index
        %36 = vector.load %arg7[%c0_31, %c0_32] : memref<1x1xf32, #tpu.memory_space<vmem>>, vector<1x1xf32>
        %37 = vector.broadcast %36 : vector<1x1xf32> to vector<2x1xf32>
        %38 = arith.addf %35, %37 : vector<2x1xf32>
        %39 = arith.negf %38 : vector<2x1xf32>
        %40 = math.exp %39 : vector<2x1xf32>
        %cst_33 = arith.constant 1.000000e+00 : f32
        %41 = vector.broadcast %cst_33 : f32 to vector<2x1xf32>
        %42 = arith.addf %41, %40 : vector<2x1xf32>
        %43 = arith.divf %41, %42 : vector<2x1xf32>
        %44 = vector.shape_cast %43 : vector<2x1xf32> to vector<2x1xf32>
        %45 = vector.broadcast %44 : vector<2x1xf32> to vector<2x128xf32>
        %c0_34 = arith.constant 0 : index
        %c0_35 = arith.constant 0 : index
        %46 = vector.load %arg8[%c0_34, %c0_35] : memref<2x128xf32, #tpu.memory_space<vmem>>, vector<2x128xf32>
        tpu.vector_store %arg8[%c0_34, %c0_35], %45 {strides = array<i32>} : memref<2x128xf32, #tpu.memory_space<vmem>>, vector<2x128xf32>,
      } else {
      }
    } else {
    }
    return
  }
  func.func @transform_0(%arg0: i32, %arg1: i32, %arg2: i32) -> (i32, i32, i32, i32) {
    %c0_i32 = arith.constant 0 : i32
    %c0_i32_0 = arith.constant 0 : i32
    return %arg1, %arg0, %arg2, %c0_i32 : i32, i32, i32, i32
  }
  func.func @transform_1(%arg0: i32, %arg1: i32, %arg2: i32) -> (i32, i32, i32) {
    %c0_i32 = arith.constant 0 : i32
    %c0_i32_0 = arith.constant 0 : i32
    %c0_i32_1 = arith.constant 0 : i32
    return %arg1, %c0_i32, %c0_i32_0 : i32, i32, i32
  }
  func.func @transform_2(%arg0: i32, %arg1: i32, %arg2: i32) -> (i32, i32) {
    %c0_i32 = arith.constant 0 : i32
    %c0_i32_0 = arith.constant 0 : i32
    %c0_i32_1 = arith.constant 0 : i32
    return %c0_i32, %c0_i32_0 : i32, i32
  }
  func.func @transform_3(%arg0: i32, %arg1: i32, %arg2: i32) -> (i32, i32) {
    %c0_i32 = arith.constant 0 : i32
    %c0_i32_0 = arith.constant 0 : i32
    %c0_i32_1 = arith.constant 0 : i32
    return %c0_i32, %c0_i32_0 : i32, i32
  }
  func.func @transform_4(%arg0: i32, %arg1: i32, %arg2: i32) -> (i32, i32) {
    %c0_i32 = arith.constant 0 : i32
    %c0_i32_0 = arith.constant 0 : i32
    %c0_i32_1 = arith.constant 0 : i32
    return %c0_i32, %c0_i32_0 : i32, i32
  }
  func.func @transform_5(%arg0: i32, %arg1: i32, %arg2: i32) -> (i32, i32) {
    %c0_i32 = arith.constant 0 : i32
    %c0_i32_0 = arith.constant 0 : i32
    return %arg0, %c0_i32 : i32, i32
  }
}

</mosaic_0001>

<llo_original>
// kernel: iqa_merge_net_forward.1
$region0: #{iqa_merge_net_forward.1}
  #allocation0 [shape = 'u32[]', space=smem, size = 0x4, offset = 0x4, fixed_abs, tag = 'smem constant byte address 0x4 - core index']
  #allocation1 [shape = 'u32[72,128]{1,0:T(1,128)}', space=vmem, size = 0x9000, scoped, tag = 'internal scratch']
  #allocation2 [shape = 'f32[2,512]{1,0:T(2,128)}', space=vmem, size = 0x1000, scoped, tag = 'scratch operand']
  #allocation3 [shape = 'f32[2,512]{1,0:T(2,128)}', space=vmem, size = 0x1000, scoped, tag = 'scratch operand']
  #allocation4 [shape = 'f32[1,1]{1,0:T(1,128)S(1)}', space=vmem, size = 0x200, scoped, tag = 'scoped memory for iqa_merge_net_forward.1']
  %s0 = inlined_call_operand.vmem [shape: f32[3,2,64,512], index: 0, kind: input, shape index: {}]
  %s1 = inlined_call_operand.hbm [shape: f32[3,512,512], index: 1, kind: input, shape index: {}]
  %s2 = inlined_call_operand.hbm [shape: f32[1,512], index: 2, kind: input, shape index: {}]
  %s3 = inlined_call_operand.hbm [shape: f32[1,512], index: 3, kind: input, shape index: {}]
  %s4 = inlined_call_operand.<no memory space> [shape: f32[1,1], index: 4, kind: input, shape index: {}]
  %s5 = inlined_call_operand.vmem [shape: f32[2,128], index: 5, kind: output, shape index: {}]
  %s6 = sld [smem:[#allocation0]]
  $region81: #{iqa_merge_net_forward.1} parent=0
    _
  %s8 = ssub.s32 1, %s6
  %s9 = scalar_select 0, %s8, %s6
  %v10 = vstv %s4
  %11 = vst [vmem:[#allocation4] sm:$0x1] %v10
  $region1: #{iqa_merge_net_forward.1} parent=0
    #allocation5 [shape = 'u8[2097152]{0}', space=vmem, size = 0x200000, scoped, tag = 'input window, operand 1']
    #allocation6 [shape = 's32[2]{0}', space=sflag, size = 0x8, scoped, tag = 'scoped memory for iqa_merge_net_forward.1']
    #allocation7 [shape = 'u8[2048]{0}', space=vmem, size = 0x800, scoped, tag = 'input window, operand 2, single buffered']
    #allocation8 [shape = 's32[1]{0}', space=sflag, size = 0x4, scoped, tag = 'scoped memory for iqa_merge_net_forward.1']
    #allocation9 [shape = 'u8[2048]{0}', space=vmem, size = 0x800, scoped, tag = 'input window, operand 3, single buffered']
    %12 = vsyncpa [#allocation6], 0
    %s13 = scalar_lea.sflag [#allocation6], 1
    %14 = vsyncpa %s13, 0
    %15 = vsyncpa [#allocation8], 0
    loop: start=0, step=1, limit=5
    $region2: #{iqa_merge_net_forward.1} parent=1 // loop_pre_header
      _
    $region3: #{iqa_merge_net_forward.1} parent=1 // loop_header
      %s17 = sphi 0, %s21
      %p18 = scmp.ge.s32.totalorder %s17, 5
      %s24 = sphi 0, %s43
      %s25 = sphi 0, %s39
      %s26 = sphi 0, %s35
      %s27 = sphi 0, %s24
      %s28 = sphi 0, %s25
      %s29 = sphi 0, %s26
      %s30 = sphi 0, %s27
      %s31 = sphi 0, %s28
      %s32 = sphi 0, %s29
      %s50 = sphi 0, %s52
      %s53 = sphi 0, %s50
      %s54 = sphi 0, %s53
      %s70 = sphi 0, %s54
      %s76 = sphi 0, %s78
      %s79 = sphi 0, %s76
      %s80 = sphi 0, %s79
      %s96 = sphi 0, %s80
      %s100 = sphi 0, %s100
      %s102 = sphi 0, %s100
      %s103 = sphi 0, %s102
      %s117 = sphi 0, %s103
      %s121 = sphi 0, %s121
      %s123 = sphi 0, %s121
      %s124 = sphi 0, %s123
      %s138 = sphi 0, %s124
      %s142 = sphi 0, %s142
      %s144 = sphi 0, %s142
      %s145 = sphi 0, %s144
      %s159 = sphi 0, %s145
      %s165 = sphi 0, %s167
      %s168 = sphi 0, %s165
      %s169 = sphi 0, %s168
      %s185 = sphi 0, %s169
    $region4: #{iqa_merge_net_forward.1} parent=1 // loop_header_branch
      %20 = sbr.rel (%p18) target = $region8
    $region5: #{iqa_merge_net_forward.1} parent=1 // loop_body
      %s22 = ssub.s32 %s17, 1
      %s23 = ssub.s32 %s17, 2
      %s33 = sadd.s32 1, %s26
      %p34 = scmp.ge.s32.totalorder %s33, 1
      %s35 = scalar_select %p34, 0, %s33
      %s36 = sadd.s32 1, %s25
      %s37 = scalar_select %p34, %s36, %s25
      %p38 = scmp.ge.s32.totalorder %s37, 3
      %s39 = scalar_select %p38, 0, %s37
      %s40 = sadd.s32 1, %s24
      %s41 = scalar_select %p38, %s40, %s24
      %p42 = scmp.ge.s32.totalorder %s41, 1
      %s43 = scalar_select %p42, 0, %s41
      %s44 = ssub.s32 %s25, %s39
      %s45 = ssub.s32 %s24, %s43
      %s46 = sor.u32 %s44, %s45
      %s47 = ssub.s32 %s26, %s35
      %s48 = sor.u32 %s46, %s47
      %p49 = scmp.eq.s32.totalorder %s48, 0
      %s51 = sadd.s32 %s50, 1
      %s52 = scalar_select %p49, %s50, %s51
      %p55 = pneg %p49
      %p56 = scmp.eq.s32.totalorder %s17, 2
      %p57 = por %p55, %p56
      %p58 = scmp.ne.s32.totalorder %s50, %s53
      %p59 = scmp.eq.s32.totalorder %s17, 0
      %p60 = por %p58, %p59
      %p61 = scmp.ne.s32.totalorder %s50, %s53
      %p62 = scmp.eq.s32.totalorder %s22, 2
      %p63 = por %p61, %p62
      %p64 = scmp.ne.s32.totalorder %s53, %s54
      %p65 = scmp.eq.s32.totalorder %s22, 0
      %p66 = por %p64, %p65
      %p67 = scmp.ne.s32.totalorder %s53, %s54
      %p68 = scmp.eq.s32.totalorder %s23, 2
      %p69 = por %p67, %p68
      %p71 = scmp.ne.s32.totalorder %s54, %s70
      %p72 = scmp.eq.s32.totalorder %s23, 0
      %p73 = por %p71, %p72
      %s74 = ssub.s32 %s25, %s39
      %p75 = scmp.eq.s32.totalorder %s74, 0
      %s77 = sadd.s32 %s76, 1
      %s78 = scalar_select %p75, %s76, %s77
      %p81 = pneg %p75
      %p82 = scmp.eq.s32.totalorder %s17, 2
      %p83 = por %p81, %p82
      %p84 = scmp.ne.s32.totalorder %s76, %s79
      %p85 = scmp.eq.s32.totalorder %s17, 0
      %p86 = por %p84, %p85
      %p87 = scmp.ne.s32.totalorder %s76, %s79
      %p88 = scmp.eq.s32.totalorder %s22, 2
      %p89 = por %p87, %p88
      %p90 = scmp.ne.s32.totalorder %s79, %s80
      %p91 = scmp.eq.s32.totalorder %s22, 0
      %p92 = por %p90, %p91
      %p93 = scmp.ne.s32.totalorder %s79, %s80
      %p94 = scmp.eq.s32.totalorder %s23, 2
      %p95 = por %p93, %p94
      %p97 = scmp.ne.s32.totalorder %s80, %s96
      %p98 = scmp.eq.s32.totalorder %s23, 0
      %p99 = por %p97, %p98
      %s101 = sadd.s32 %s100, 1
      %p104 = scmp.eq.s32.totalorder %s17, 2
      %p105 = scmp.ne.s32.totalorder %s100, %s102
      %p106 = scmp.eq.s32.totalorder %s17, 0
      %p107 = por %p105, %p106
      %p108 = scmp.ne.s32.totalorder %s100, %s102
      %p109 = scmp.eq.s32.totalorder %s22, 2
      %p110 = por %p108, %p109
      %p111 = scmp.ne.s32.totalorder %s102, %s103
      %p112 = scmp.eq.s32.totalorder %s22, 0
      %p113 = por %p111, %p112
      %p114 = scmp.ne.s32.totalorder %s102, %s103
      %p115 = scmp.eq.s32.totalorder %s23, 2
      %p116 = por %p114, %p115
      %p118 = scmp.ne.s32.totalorder %s103, %s117
      %p119 = scmp.eq.s32.totalorder %s23, 0
      %p120 = por %p118, %p119
      %s122 = sadd.s32 %s121, 1
      %p125 = scmp.eq.s32.totalorder %s17, 2
      %p126 = scmp.ne.s32.totalorder %s121, %s123
      %p127 = scmp.eq.s32.totalorder %s17, 0
      %p128 = por %p126, %p127
      %p129 = scmp.ne.s32.totalorder %s121, %s123
      %p130 = scmp.eq.s32.totalorder %s22, 2
      %p131 = por %p129, %p130
      %p132 = scmp.ne.s32.totalorder %s123, %s124
      %p133 = scmp.eq.s32.totalorder %s22, 0
      %p134 = por %p132, %p133
      %p135 = scmp.ne.s32.totalorder %s123, %s124
      %p136 = scmp.eq.s32.totalorder %s23, 2
      %p137 = por %p135, %p136
      %p139 = scmp.ne.s32.totalorder %s124, %s138
      %p140 = scmp.eq.s32.totalorder %s23, 0
      %p141 = por %p139, %p140
      %s143 = sadd.s32 %s142, 1
      %p146 = scmp.eq.s32.totalorder %s17, 2
      %p147 = scmp.ne.s32.totalorder %s142, %s144
      %p148 = scmp.eq.s32.totalorder %s17, 0
      %p149 = por %p147, %p148
      %p150 = scmp.ne.s32.totalorder %s142, %s144
      %p151 = scmp.eq.s32.totalorder %s22, 2
      %p152 = por %p150, %p151
      %p153 = scmp.ne.s32.totalorder %s144, %s145
      %p154 = scmp.eq.s32.totalorder %s22, 0
      %p155 = por %p153, %p154
      %p156 = scmp.ne.s32.totalorder %s144, %s145
      %p157 = scmp.eq.s32.totalorder %s23, 2
      %p158 = por %p156, %p157
      %p160 = scmp.ne.s32.totalorder %s145, %s159
      %p161 = scmp.eq.s32.totalorder %s23, 0
      %p162 = por %p160, %p161
      %s163 = ssub.s32 %s24, %s43
      %p164 = scmp.eq.s32.totalorder %s163, 0
      %s166 = sadd.s32 %s165, 1
      %s167 = scalar_select %p164, %s165, %s166
      %p170 = pneg %p164
      %p171 = scmp.eq.s32.totalorder %s17, 2
      %p172 = por %p170, %p171
      %p173 = scmp.ne.s32.totalorder %s165, %s168
      %p174 = scmp.eq.s32.totalorder %s17, 0
      %p175 = por %p173, %p174
      %p176 = scmp.ne.s32.totalorder %s165, %s168
      %p177 = scmp.eq.s32.totalorder %s22, 2
      %p178 = por %p176, %p177
      %p179 = scmp.ne.s32.totalorder %s168, %s169
      %p180 = scmp.eq.s32.totalorder %s22, 0
      %p181 = por %p179, %p180
      %p182 = scmp.ne.s32.totalorder %s168, %s169
      %p183 = scmp.eq.s32.totalorder %s23, 2
      %p184 = por %p182, %p183
      %p186 = scmp.ne.s32.totalorder %s169, %s185
      %p187 = scmp.eq.s32.totalorder %s23, 0
      %p188 = por %p186, %p187
      %p189 = scmp.le.s32.totalorder 1, %s17
      %p190 = scmp.lt.s32.totalorder %s17, 4
      %p191 = pnand %p189, %p190
      %p192 = pneg %p191
      // Predicated region
      $region9: #{iqa_merge_net_forward.1} parent=5 // pred_check
        _
      $region10: #{iqa_merge_net_forward.1} parent=5 // pred_check_branch
        %194 = sbr.rel (%p191) target = $region12
      $region11: #{iqa_merge_net_forward.1} parent=5 // pred_region
        %s195 = ssub.s32 %s17, 1
        // Predicated region
        $region13: #{iqa_merge_net_forward.1} parent=11 // pred_check
          %p196 = pneg %p113
        $region14: #{iqa_merge_net_forward.1} parent=11 // pred_check_branch
          %198 = sbr.rel (%p196) target = $region16
        $region15: #{iqa_merge_net_forward.1} parent=11 // pred_region
          %200 = vsyncadd [#allocation8], 0
          %s202 = sshll.u32 %s2, 4
          %s203 = int_to_ptr.hbm [resolvable:$true] %s202
          %s204 = sshll.u32 [#allocation7], 4
          %s205 = int_to_ptr.vmem [resolvable:$true] %s204
          %207 = dma.hbm_to_vmem [thread:$0]  %s203, 64, %s205, [#allocation8]
        $region16: #{iqa_merge_net_forward.1} parent=11 // pred_fallthru
          _
        // Predicated region
        $region17: #{iqa_merge_net_forward.1} parent=11 // pred_check
          %p208 = pneg %p134
        $region18: #{iqa_merge_net_forward.1} parent=11 // pred_check_branch
          %210 = sbr.rel (%p208) target = $region20
        $region19: #{iqa_merge_net_forward.1} parent=11 // pred_region
          %212 = vsyncadd [#allocation8], 0
          %s214 = sshll.u32 %s3, 4
          %s215 = int_to_ptr.hbm [resolvable:$true] %s214
          %s216 = sshll.u32 [#allocation9], 4
          %s217 = int_to_ptr.vmem [resolvable:$true] %s216
          %219 = dma.hbm_to_vmem [thread:$0]  %s215, 64, %s217, [#allocation8]
        $region20: #{iqa_merge_net_forward.1} parent=11 // pred_fallthru
          _
        // Predicated region
        $region21: #{iqa_merge_net_forward.1} parent=11 // pred_check
          %p220 = pneg %p155
        $region22: #{iqa_merge_net_forward.1} parent=11 // pred_check_branch
          %222 = sbr.rel (%p220) target = $region24
        $region23: #{iqa_merge_net_forward.1} parent=11 // pred_region
          _
        $region24: #{iqa_merge_net_forward.1} parent=11 // pred_fallthru
          _
      $region12: #{iqa_merge_net_forward.1} parent=5 // pred_fallthru
        _
      %p223 = scmp.lt.s32.totalorder %s17, 3
      // Predicated region
      $region25: #{iqa_merge_net_forward.1} parent=5 // pred_check
        %p224 = pneg %p223
      $region26: #{iqa_merge_net_forward.1} parent=5 // pred_check_branch
        %226 = sbr.rel (%p224) target = $region28
      $region27: #{iqa_merge_net_forward.1} parent=5 // pred_region
        // Predicated region
        $region29: #{iqa_merge_net_forward.1} parent=27 // pred_check
          %p227 = pneg %p60
        $region30: #{iqa_merge_net_forward.1} parent=27 // pred_check_branch
          %229 = sbr.rel (%p227) target = $region32
        $region31: #{iqa_merge_net_forward.1} parent=27 // pred_region
          %s230 = smul.u32 2, %s24
          %s231 = smul.u32 8, %s26
          %p232 = scmp.lt.s32.totalorder %s25, 2
          %s233 = scalar_select %p232, %s25, 2
          %p234 = scmp.lt.s32.totalorder %s230, 1
          %s235 = scalar_select %p234, %s230, 1
          %p236 = scmp.lt.s32.totalorder %s231, 7
          %s237 = scalar_select %p236, %s231, 7
          %s238 = smul.addr %s237, 4
          %s239 = smul.addr %s235, 32
          %s240 = sadd.s32 %s238, %s239
          %s241 = smul.addr %s233, 64
          %s242 = sadd.s32 %s240, %s241
          %s243 = smul.addr %s242, 8
          %s244 = scalar_lea.vmem %s0, %s243
          %s245 = smul.u32 2, %s24
          %s246 = smul.u32 8, %s26
        $region32: #{iqa_merge_net_forward.1} parent=27 // pred_fallthru
          _
        // Predicated region
        $region33: #{iqa_merge_net_forward.1} parent=27 // pred_check
          %p247 = pneg %p86
        $region34: #{iqa_merge_net_forward.1} parent=27 // pred_check_branch
          %249 = sbr.rel (%p247) target = $region36
        $region35: #{iqa_merge_net_forward.1} parent=27 // pred_region
          %s250 = sand.u32 %s76, 1
          %s251 = scalar_lea.sflag [#allocation6], %s250
          %s252 = sand.u32 %s76, 1
          %s253 = smul.addr %s252, 2048
          %s254 = scalar_lea.vmem [#allocation5], %s253
          %256 = vsyncadd %s251, 0
          %s257 = smul.addr %s25, 256
          %s258 = smul.addr %s257, 8
          %s259 = scalar_lea.hbm %s1, %s258
          %s260 = sshll.u32 %s259, 4
          %s261 = int_to_ptr.hbm [resolvable:$true] %s260
          %s262 = sshll.u32 %s254, 4
          %s263 = int_to_ptr.vmem [resolvable:$true] %s262
          %268 = dma.hbm_to_vmem [thread:$0]  %s261, 32768, %s263, %s251, 512, 512, 32
        $region36: #{iqa_merge_net_forward.1} parent=27 // pred_fallthru
          _
      $region28: #{iqa_merge_net_forward.1} parent=5 // pred_fallthru
        _
      %p269 = scmp.le.s32.totalorder 1, %s17
      %p270 = scmp.lt.s32.totalorder %s17, 4
      %p271 = pnand %p269, %p270
      %p272 = pneg %p271
      // Predicated region
      $region37: #{iqa_merge_net_forward.1} parent=5 // pred_check
        _
      $region38: #{iqa_merge_net_forward.1} parent=5 // pred_check_branch
        %274 = sbr.rel (%p271) target = $region40
      $region39: #{iqa_merge_net_forward.1} parent=5 // pred_region
        %s275 = ssub.s32 %s17, 1
        %s276 = sand.u32 %s79, 1
        %s277 = scalar_lea.sflag [#allocation6], %s276
        %s278 = sand.u32 %s79, 1
        %s279 = smul.addr %s278, 2048
        %s280 = scalar_lea.vmem [#allocation5], %s279
        // Predicated region
        $region41: #{iqa_merge_net_forward.1} parent=39 // pred_check
          %p281 = pneg %p92
        $region42: #{iqa_merge_net_forward.1} parent=39 // pred_check_branch
          %283 = sbr.rel (%p281) target = $region44
        $region43: #{iqa_merge_net_forward.1} parent=39 // pred_region
          %285 = dma.done %s277, 32768
        $region44: #{iqa_merge_net_forward.1} parent=39 // pred_fallthru
          _
        // Predicated region
        $region45: #{iqa_merge_net_forward.1} parent=39 // pred_check
          %p286 = pneg %p113
        $region46: #{iqa_merge_net_forward.1} parent=39 // pred_check_branch
          %288 = sbr.rel (%p286) target = $region48
        $region47: #{iqa_merge_net_forward.1} parent=39 // pred_region
          %290 = dma.done [#allocation8], 64
        $region48: #{iqa_merge_net_forward.1} parent=39 // pred_fallthru
          _
        // Predicated region
        $region49: #{iqa_merge_net_forward.1} parent=39 // pred_check
          %p291 = pneg %p134
        $region50: #{iqa_merge_net_forward.1} parent=39 // pred_check_branch
          %293 = sbr.rel (%p291) target = $region52
        $region51: #{iqa_merge_net_forward.1} parent=39 // pred_region
          %295 = dma.done [#allocation8], 64
        $region52: #{iqa_merge_net_forward.1} parent=39 // pred_fallthru
          _
        %s296 = smul.u32 2, %s27
        %s297 = smul.u32 8, %s29
        %p298 = scmp.lt.s32.totalorder %s28, 2
        %s299 = scalar_select %p298, %s28, 2
        %p300 = scmp.lt.s32.totalorder %s296, 1
        %s301 = scalar_select %p300, %s296, 1
        %p302 = scmp.lt.s32.totalorder %s297, 7
        %s303 = scalar_select %p302, %s297, 7
        %s304 = smul.addr %s303, 4
        %s305 = smul.addr %s301, 32
        %s306 = sadd.s32 %s304, %s305
        %s307 = smul.addr %s299, 64
        %s308 = sadd.s32 %s306, %s307
        %s309 = smul.addr %s308, 8
        %s310 = scalar_lea.vmem %s0, %s309
        %p311 = pneg %p66
        %p312 = pneg %p63
        %s313 = sand.u32 %s79, 1
        %s314 = scalar_lea.sflag [#allocation6], %s313
        %s315 = sand.u32 %s79, 1
        %s316 = smul.addr %s315, 2048
        %s317 = scalar_lea.vmem [#allocation5], %s316
        %p318 = pneg %p92
        %p319 = pneg %p89
        %p320 = pneg %p113
        %p321 = pneg %p110
        %p322 = pneg %p134
        %p323 = pneg %p131
        %p324 = pneg %p155
        %p325 = pneg %p152
        %p326 = pneg %p181
        %p327 = pneg %p178
        %p328 = scmp.lt.s32.totalorder %s27, 0
        %s329 = scalar_select %p328, %s27, 0
        %s330 = smul.addr %s329, 2
        %s331 = scalar_lea.vmem %s5, %s330
        %s332 = smul.u32 2, %s27
        %s333 = smul.u32 8, %s29
        %p334 = scmp.lt.s32.totalorder %s28, 2
        %s335 = scalar_select %p334, %s28, 2
        %p336 = scmp.lt.s32.totalorder %s332, 1
        %s337 = scalar_select %p336, %s332, 1
        %p338 = scmp.lt.s32.totalorder %s333, 7
        %s339 = scalar_select %p338, %s333, 7
        %s340 = smul.addr %s339, 4
        %s341 = smul.addr %s337, 32
        %s342 = sadd.s32 %s340, %s341
        %s343 = smul.addr %s335, 64
        %s344 = sadd.s32 %s342, %s343
        %s345 = smul.addr %s344, 8
        %s346 = scalar_lea.vmem %s0, %s345
        %s347 = smul.u32 2, %s27
        %s348 = smul.u32 8, %s29
        %p349 = scmp.lt.s32.totalorder %s27, 0
        %s350 = scalar_select %p349, %s27, 0
        %s351 = smul.addr %s350, 2
        %s352 = scalar_lea.vmem %s5, %s351
        %v353 = vld [vmem:[%s346] sm:$0xff]
        %v354 = vld [vmem:[%s346 + $0x8] sm:$0xff]
        %v355 = vld [vmem:[%s346 + $0x10] sm:$0xff]
        %v356 = vld [vmem:[%s346 + $0x18] sm:$0xff]
        %v357 = vld [vmem:[%s346 + $0x20] sm:$0xff]
        %v358 = vld [vmem:[%s346 + $0x28] sm:$0xff]
        %v359 = vld [vmem:[%s346 + $0x30] sm:$0xff]
        %v360 = vld [vmem:[%s346 + $0x38] sm:$0xff]
        %v361 = vld [vmem:[%s346 + $0x40] sm:$0xff]
        %v362 = vld [vmem:[%s346 + $0x48] sm:$0xff]
        %v363 = vld [vmem:[%s346 + $0x50] sm:$0xff]
        %v364 = vld [vmem:[%s346 + $0x58] sm:$0xff]
        %v365 = vld [vmem:[%s346 + $0x60] sm:$0xff]
        %v366 = vld [vmem:[%s346 + $0x68] sm:$0xff]
        %v367 = vld [vmem:[%s346 + $0x70] sm:$0xff]
        %v368 = vld [vmem:[%s346 + $0x78] sm:$0xff]
        %v369 = vld [vmem:[%s346 + $0x80] sm:$0xff]
        %v370 = vld [vmem:[%s346 + $0x88] sm:$0xff]
        %v371 = vld [vmem:[%s346 + $0x90] sm:$0xff]
        %v372 = vld [vmem:[%s346 + $0x98] sm:$0xff]
        %v373 = vld [vmem:[%s346 + $0xa0] sm:$0xff]
        %v374 = vld [vmem:[%s346 + $0xa8] sm:$0xff]
        %v375 = vld [vmem:[%s346 + $0xb0] sm:$0xff]
        %v376 = vld [vmem:[%s346 + $0xb8] sm:$0xff]
        %v377 = vld [vmem:[%s346 + $0xc0] sm:$0xff]
        %v378 = vld [vmem:[%s346 + $0xc8] sm:$0xff]
        %v379 = vld [vmem:[%s346 + $0xd0] sm:$0xff]
        %v380 = vld [vmem:[%s346 + $0xd8] sm:$0xff]
        %v381 = vld [vmem:[%s346 + $0xe0] sm:$0xff]
        %v382 = vld [vmem:[%s346 + $0xe8] sm:$0xff]
        %v383 = vld [vmem:[%s346 + $0xf0] sm:$0xff]
        %v384 = vld [vmem:[%s346 + $0xf8] sm:$0xff]
        %v385 = vld [vmem:[%s346 + $0x100] sm:$0xff]
        %v386 = vld [vmem:[%s346 + $0x108] sm:$0xff]
        %v387 = vld [vmem:[%s346 + $0x110] sm:$0xff]
        %v388 = vld [vmem:[%s346 + $0x118] sm:$0xff]
        %v389 = vld [vmem:[%s346 + $0x120] sm:$0xff]
        %v390 = vld [vmem:[%s346 + $0x128] sm:$0xff]
        %v391 = vld [vmem:[%s346 + $0x130] sm:$0xff]
        %v392 = vld [vmem:[%s346 + $0x138] sm:$0xff]
        %v393 = vld [vmem:[%s346 + $0x140] sm:$0xff]
        %v394 = vld [vmem:[%s346 + $0x148] sm:$0xff]
        %v395 = vld [vmem:[%s346 + $0x150] sm:$0xff]
        %v396 = vld [vmem:[%s346 + $0x158] sm:$0xff]
        %v397 = vld [vmem:[%s346 + $0x160] sm:$0xff]
        %v398 = vld [vmem:[%s346 + $0x168] sm:$0xff]
        %v399 = vld [vmem:[%s346 + $0x170] sm:$0xff]
        %v400 = vld [vmem:[%s346 + $0x178] sm:$0xff]
        %v401 = vld [vmem:[%s346 + $0x180] sm:$0xff]
        %v402 = vld [vmem:[%s346 + $0x188] sm:$0xff]
        %v403 = vld [vmem:[%s346 + $0x190] sm:$0xff]
        %v404 = vld [vmem:[%s346 + $0x198] sm:$0xff]
        %v405 = vld [vmem:[%s346 + $0x1a0] sm:$0xff]
        %v406 = vld [vmem:[%s346 + $0x1a8] sm:$0xff]
        %v407 = vld [vmem:[%s346 + $0x1b0] sm:$0xff]
        %v408 = vld [vmem:[%s346 + $0x1b8] sm:$0xff]
        %v409 = vld [vmem:[%s346 + $0x1c0] sm:$0xff]
        %v410 = vld [vmem:[%s346 + $0x1c8] sm:$0xff]
        %v411 = vld [vmem:[%s346 + $0x1d0] sm:$0xff]
        %v412 = vld [vmem:[%s346 + $0x1d8] sm:$0xff]
        %v413 = vld [vmem:[%s346 + $0x1e0] sm:$0xff]
        %v414 = vld [vmem:[%s346 + $0x1e8] sm:$0xff]
        %v415 = vld [vmem:[%s346 + $0x1f0] sm:$0xff]
        %v416 = vld [vmem:[%s346 + $0x1f8] sm:$0xff]
        %v417 = vmax.f32 %v353, %v357
        %v418 = vmax.f32 %v417, %v361
        %v419 = vmax.f32 %v418, %v365
        %v420 = vmax.f32 %v419, %v369
        %v421 = vmax.f32 %v420, %v373
        %v422 = vmax.f32 %v421, %v377
        %v423 = vmax.f32 %v422, %v381
        %v424 = vrot.slane %v423, 4
        %v425 = vmax.f32 %v423, %v424
        %v426 = vrot.slane %v425, 2
        %v427 = vmax.f32 %v425, %v426
        %v428 = vrot.slane %v427, 1
        %v429 = vmax.f32 %v427, %v428
        %v430 = vmax.f32 %v354, %v358
        %v431 = vmax.f32 %v430, %v362
        %v432 = vmax.f32 %v431, %v366
        %v433 = vmax.f32 %v432, %v370
        %v434 = vmax.f32 %v433, %v374
        %v435 = vmax.f32 %v434, %v378
        %v436 = vmax.f32 %v435, %v382
        %v437 = vrot.slane %v436, 4
        %v438 = vmax.f32 %v436, %v437
        %v439 = vrot.slane %v438, 2
        %v440 = vmax.f32 %v438, %v439
        %v441 = vrot.slane %v440, 1
        %v442 = vmax.f32 %v440, %v441
        %v443 = vmax.f32 %v355, %v359
        %v444 = vmax.f32 %v443, %v363
        %v445 = vmax.f32 %v444, %v367
        %v446 = vmax.f32 %v445, %v371
        %v447 = vmax.f32 %v446, %v375
        %v448 = vmax.f32 %v447, %v379
        %v449 = vmax.f32 %v448, %v383
        %v450 = vrot.slane %v449, 4
        %v451 = vmax.f32 %v449, %v450
        %v452 = vrot.slane %v451, 2
        %v453 = vmax.f32 %v451, %v452
        %v454 = vrot.slane %v453, 1
        %v455 = vmax.f32 %v453, %v454
        %v456 = vmax.f32 %v356, %v360
        %v457 = vmax.f32 %v456, %v364
        %v458 = vmax.f32 %v457, %v368
        %v459 = vmax.f32 %v458, %v372
        %v460 = vmax.f32 %v459, %v376
        %v461 = vmax.f32 %v460, %v380
        %v462 = vmax.f32 %v461, %v384
        %v463 = vrot.slane %v462, 4
        %v464 = vmax.f32 %v462, %v463
        %v465 = vrot.slane %v464, 2
        %v466 = vmax.f32 %v464, %v465
        %v467 = vrot.slane %v466, 1
        %v468 = vmax.f32 %v466, %v467
        %v469 = vmax.f32 %v385, %v389
        %v470 = vmax.f32 %v469, %v393
        %v471 = vmax.f32 %v470, %v397
        %v472 = vmax.f32 %v471, %v401
        %v473 = vmax.f32 %v472, %v405
        %v474 = vmax.f32 %v473, %v409
        %v475 = vmax.f32 %v474, %v413
        %v476 = vrot.slane %v475, 4
        %v477 = vmax.f32 %v475, %v476
        %v478 = vrot.slane %v477, 2
        %v479 = vmax.f32 %v477, %v478
        %v480 = vrot.slane %v479, 1
        %v481 = vmax.f32 %v479, %v480
        %v482 = vmax.f32 %v386, %v390
        %v483 = vmax.f32 %v482, %v394
        %v484 = vmax.f32 %v483, %v398
        %v485 = vmax.f32 %v484, %v402
        %v486 = vmax.f32 %v485, %v406
        %v487 = vmax.f32 %v486, %v410
        %v488 = vmax.f32 %v487, %v414
        %v489 = vrot.slane %v488, 4
        %v490 = vmax.f32 %v488, %v489
        %v491 = vrot.slane %v490, 2
        %v492 = vmax.f32 %v490, %v491
        %v493 = vrot.slane %v492, 1
        %v494 = vmax.f32 %v492, %v493
        %v495 = vmax.f32 %v387, %v391
        %v496 = vmax.f32 %v495, %v395
        %v497 = vmax.f32 %v496, %v399
        %v498 = vmax.f32 %v497, %v403
        %v499 = vmax.f32 %v498, %v407
        %v500 = vmax.f32 %v499, %v411
        %v501 = vmax.f32 %v500, %v415
        %v502 = vrot.slane %v501, 4
        %v503 = vmax.f32 %v501, %v502
        %v504 = vrot.slane %v503, 2
        %v505 = vmax.f32 %v503, %v504
        %v506 = vrot.slane %v505, 1
        %v507 = vmax.f32 %v505, %v506
        %v508 = vmax.f32 %v388, %v392
        %v509 = vmax.f32 %v508, %v396
        %v510 = vmax.f32 %v509, %v400
        %v511 = vmax.f32 %v510, %v404
        %v512 = vmax.f32 %v511, %v408
        %v513 = vmax.f32 %v512, %v412
        %v514 = vmax.f32 %v513, %v416
        %v515 = vrot.slane %v514, 4
        %v516 = vmax.f32 %v514, %v515
        %v517 = vrot.slane %v516, 2
        %v518 = vmax.f32 %v516, %v517
        %v519 = vrot.slane %v518, 1
        %v520 = vmax.f32 %v518, %v519
        %p521 = scmp.eq.s32.totalorder %s29, 0
        // Predicated region
        $region53: #{iqa_merge_net_forward.1} parent=39 // pred_check
          %p522 = pneg %p521
        $region54: #{iqa_merge_net_forward.1} parent=39 // pred_check_branch
          %524 = sbr.rel (%p522) target = $region56
        $region55: #{iqa_merge_net_forward.1} parent=39 // pred_region
          %525 = vst [vmem:[#allocation2] sm:$0xff] -inf
        $region56: #{iqa_merge_net_forward.1} parent=39 // pred_fallthru
          _
        %v526 = vld [vmem:[#allocation2] sm:$0xff]
        %v535 = vrot.slane %v442, 6
        %v536 = vrot.slane %v455, 4
        %v537 = vrot.slane %v468, 2
        %v538 = vrot.slane %v494, 6
        %v539 = vrot.slane %v507, 4
        %v540 = vrot.slane %v520, 2
        %vm541 = vcmask 1041408
        %v542 = vsel %vm541, %v429, %v535
        %vm543 = vcmask 1045508
        %v544 = vsel %vm543, %v536, %v537
        %vm545 = vcmask 1043456
        %v546 = vsel %vm545, %v542, %v544
        %v547 = vsel %vm541, %v481, %v538
        %v548 = vsel %vm543, %v539, %v540
        %v549 = vsel %vm545, %v547, %v548
        %vm550 = vcmask 1044484
        %v551 = vsel %vm550, %v546, %v546
        %vm552 = vcmask 1046534
        %v553 = vsel %vm552, %v546, %v551
        %v554 = vrot.slane %v549, 7
        %vm555 = vcmask 1041409
        %v556 = vsel %vm555, %v554, %v553
        %vm557 = vcmask 1043459
        %v558 = vsel %vm557, %v554, %v556
        %vm559 = vcmask 1045509
        %v560 = vsel %vm559, %v554, %v558
        %vm561 = vcmask 1047559
        %v562 = vsel %vm561, %v554, %v560
        %v564 = vmax.f32 %v526, %v562
        %565 = vst [vmem:[#allocation2] sm:$0xff] %v564
        // Predicated region
        $region57: #{iqa_merge_net_forward.1} parent=39 // pred_check
          %p566 = pneg %p521
        $region58: #{iqa_merge_net_forward.1} parent=39 // pred_check_branch
          %568 = sbr.rel (%p566) target = $region60
        $region59: #{iqa_merge_net_forward.1} parent=39 // pred_region
          %p569 = scmp.eq.s32.totalorder %s28, 0
          // Predicated region
          $region61: #{iqa_merge_net_forward.1} parent=59 // pred_check
            %p570 = pneg %p569
          $region62: #{iqa_merge_net_forward.1} parent=59 // pred_check_branch
            %572 = sbr.rel (%p570) target = $region64
          $region63: #{iqa_merge_net_forward.1} parent=59 // pred_region
            %573 = vst [vmem:[#allocation3] sm:$0xff] 0.0
          $region64: #{iqa_merge_net_forward.1} parent=59 // pred_fallthru
            _
          %v574 = vld [vmem:[#allocation3] sm:$0xff]
          %v575 = vld [vmem:[#allocation2] sm:$0xff]
          %v576 = vld [vmem:[%s280] sm:$0xff]
          %v577 = vld [vmem:[%s280 + $0x8] sm:$0xff]
          %v578 = vld [vmem:[%s280 + $0x10] sm:$0xff]
          %v579 = vld [vmem:[%s280 + $0x18] sm:$0xff]
          %v580 = vld [vmem:[%s280 + $0x20] sm:$0xff]
          %v581 = vld [vmem:[%s280 + $0x28] sm:$0xff]
          %v582 = vld [vmem:[%s280 + $0x30] sm:$0xff]
          %v583 = vld [vmem:[%s280 + $0x38] sm:$0xff]
          %v584 = vld [vmem:[%s280 + $0x40] sm:$0xff]
          %v585 = vld [vmem:[%s280 + $0x48] sm:$0xff]
          %v586 = vld [vmem:[%s280 + $0x50] sm:$0xff]
          %v587 = vld [vmem:[%s280 + $0x58] sm:$0xff]
          %v588 = vld [vmem:[%s280 + $0x60] sm:$0xff]
          %v589 = vld [vmem:[%s280 + $0x68] sm:$0xff]
          %v590 = vld [vmem:[%s280 + $0x70] sm:$0xff]
          %v591 = vld [vmem:[%s280 + $0x78] sm:$0xff]
          %v592 = vld [vmem:[%s280 + $0x80] sm:$0xff]
          %v593 = vld [vmem:[%s280 + $0x88] sm:$0xff]
          %v594 = vld [vmem:[%s280 + $0x90] sm:$0xff]
          %v595 = vld [vmem:[%s280 + $0x98] sm:$0xff]
          %v596 = vld [vmem:[%s280 + $0xa0] sm:$0xff]
          %v597 = vld [vmem:[%s280 + $0xa8] sm:$0xff]
          %v598 = vld [vmem:[%s280 + $0xb0] sm:$0xff]
          %v599 = vld [vmem:[%s280 + $0xb8] sm:$0xff]
          %v600 = vld [vmem:[%s280 + $0xc0] sm:$0xff]
          %v601 = vld [vmem:[%s280 + $0xc8] sm:$0xff]
          %v602 = vld [vmem:[%s280 + $0xd0] sm:$0xff]
          %v603 = vld [vmem:[%s280 + $0xd8] sm:$0xff]
          %v604 = vld [vmem:[%s280 + $0xe0] sm:$0xff]
          %v605 = vld [vmem:[%s280 + $0xe8] sm:$0xff]
          %v606 = vld [vmem:[%s280 + $0xf0] sm:$0xff]
          %v607 = vld [vmem:[%s280 + $0xf8] sm:$0xff]
          %v608 = vld [vmem:[%s280 + $0x100] sm:$0xff]
          %v609 = vld [vmem:[%s280 + $0x108] sm:$0xff]
          %v610 = vld [vmem:[%s280 + $0x110] sm:$0xff]
          %v611 = vld [vmem:[%s280 + $0x118] sm:$0xff]
          %v612 = vld [vmem:[%s280 + $0x120] sm:$0xff]
          %v613 = vld [vmem:[%s280 + $0x128] sm:$0xff]
          %v614 = vld [vmem:[%s280 + $0x130] sm:$0xff]
          %v615 = vld [vmem:[%s280 + $0x138] sm:$0xff]
          %v616 = vld [vmem:[%s280 + $0x140] sm:$0xff]
          %v617 = vld [vmem:[%s280 + $0x148] sm:$0xff]
          %v618 = vld [vmem:[%s280 + $0x150] sm:$0xff]
          %v619 = vld [vmem:[%s280 + $0x158] sm:$0xff]
          %v620 = vld [vmem:[%s280 + $0x160] sm:$0xff]
          %v621 = vld [vmem:[%s280 + $0x168] sm:$0xff]
          %v622 = vld [vmem:[%s280 + $0x170] sm:$0xff]
          %v623 = vld [vmem:[%s280 + $0x178] sm:$0xff]
          %v624 = vld [vmem:[%s280 + $0x180] sm:$0xff]
          %v625 = vld [vmem:[%s280 + $0x188] sm:$0xff]
          %v626 = vld [vmem:[%s280 + $0x190] sm:$0xff]
          %v627 = vld [vmem:[%s280 + $0x198] sm:$0xff]
          %v628 = vld [vmem:[%s280 + $0x1a0] sm:$0xff]
          %v629 = vld [vmem:[%s280 + $0x1a8] sm:$0xff]
          %v630 = vld [vmem:[%s280 + $0x1b0] sm:$0xff]
          %v631 = vld [vmem:[%s280 + $0x1b8] sm:$0xff]
          %v632 = vld [vmem:[%s280 + $0x1c0] sm:$0xff]
          %v633 = vld [vmem:[%s280 + $0x1c8] sm:$0xff]
          %v634 = vld [vmem:[%s280 + $0x1d0] sm:$0xff]
          %v635 = vld [vmem:[%s280 + $0x1d8] sm:$0xff]
          %v636 = vld [vmem:[%s280 + $0x1e0] sm:$0xff]
          %v637 = vld [vmem:[%s280 + $0x1e8] sm:$0xff]
          %v638 = vld [vmem:[%s280 + $0x1f0] sm:$0xff]
          %v639 = vld [vmem:[%s280 + $0x1f8] sm:$0xff]
          %v640 = vld [vmem:[%s280 + $0x200] sm:$0xff]
          %v641 = vld [vmem:[%s280 + $0x208] sm:$0xff]
          %v642 = vld [vmem:[%s280 + $0x210] sm:$0xff]
          %v643 = vld [vmem:[%s280 + $0x218] sm:$0xff]
          %v644 = vld [vmem:[%s280 + $0x220] sm:$0xff]
          %v645 = vld [vmem:[%s280 + $0x228] sm:$0xff]
          %v646 = vld [vmem:[%s280 + $0x230] sm:$0xff]
          %v647 = vld [vmem:[%s280 + $0x238] sm:$0xff]
          %v648 = vld [vmem:[%s280 + $0x240] sm:$0xff]
          %v649 = vld [vmem:[%s280 + $0x248] sm:$0xff]
          %v650 = vld [vmem:[%s280 + $0x250] sm:$0xff]
          %v651 = vld [vmem:[%s280 + $0x258] sm:$0xff]
          %v652 = vld [vmem:[%s280 + $0x260] sm:$0xff]
          %v653 = vld [vmem:[%s280 + $0x268] sm:$0xff]
          %v654 = vld [vmem:[%s280 + $0x270] sm:$0xff]
          %v655 = vld [vmem:[%s280 + $0x278] sm:$0xff]
          %v656 = vld [vmem:[%s280 + $0x280] sm:$0xff]
          %v657 = vld [vmem:[%s280 + $0x288] sm:$0xff]
          %v658 = vld [vmem:[%s280 + $0x290] sm:$0xff]
          %v659 = vld [vmem:[%s280 + $0x298] sm:$0xff]
          %v660 = vld [vmem:[%s280 + $0x2a0] sm:$0xff]
          %v661 = vld [vmem:[%s280 + $0x2a8] sm:$0xff]
          %v662 = vld [vmem:[%s280 + $0x2b0] sm:$0xff]
          %v663 = vld [vmem:[%s280 + $0x2b8] sm:$0xff]
          %v664 = vld [vmem:[%s280 + $0x2c0] sm:$0xff]
          %v665 = vld [vmem:[%s280 + $0x2c8] sm:$0xff]
          %v666 = vld [vmem:[%s280 + $0x2d0] sm:$0xff]
          %v667 = vld [vmem:[%s280 + $0x2d8] sm:$0xff]
          %v668 = vld [vmem:[%s280 + $0x2e0] sm:$0xff]
          %v669 = vld [vmem:[%s280 + $0x2e8] sm:$0xff]
          %v670 = vld [vmem:[%s280 + $0x2f0] sm:$0xff]
          %v671 = vld [vmem:[%s280 + $0x2f8] sm:$0xff]
          %v672 = vld [vmem:[%s280 + $0x300] sm:$0xff]
          %v673 = vld [vmem:[%s280 + $0x308] sm:$0xff]
          %v674 = vld [vmem:[%s280 + $0x310] sm:$0xff]
          %v675 = vld [vmem:[%s280 + $0x318] sm:$0xff]
          %v676 = vld [vmem:[%s280 + $0x320] sm:$0xff]
          %v677 = vld [vmem:[%s280 + $0x328] sm:$0xff]
          %v678 = vld [vmem:[%s280 + $0x330] sm:$0xff]
          %v679 = vld [vmem:[%s280 + $0x338] sm:$0xff]
          %v680 = vld [vmem:[%s280 + $0x340] sm:$0xff]
          %v681 = vld [vmem:[%s280 + $0x348] sm:$0xff]
          %v682 = vld [vmem:[%s280 + $0x350] sm:$0xff]
          %v683 = vld [vmem:[%s280 + $0x358] sm:$0xff]
          %v684 = vld [vmem:[%s280 + $0x360] sm:$0xff]
          %v685 = vld [vmem:[%s280 + $0x368] sm:$0xff]
          %v686 = vld [vmem:[%s280 + $0x370] sm:$0xff]
          %v687 = vld [vmem:[%s280 + $0x378] sm:$0xff]
          %v688 = vld [vmem:[%s280 + $0x380] sm:$0xff]
          %v689 = vld [vmem:[%s280 + $0x388] sm:$0xff]
          %v690 = vld [vmem:[%s280 + $0x390] sm:$0xff]
          %v691 = vld [vmem:[%s280 + $0x398] sm:$0xff]
          %v692 = vld [vmem:[%s280 + $0x3a0] sm:$0xff]
          %v693 = vld [vmem:[%s280 + $0x3a8] sm:$0xff]
          %v694 = vld [vmem:[%s280 + $0x3b0] sm:$0xff]
          %v695 = vld [vmem:[%s280 + $0x3b8] sm:$0xff]
          %v696 = vld [vmem:[%s280 + $0x3c0] sm:$0xff]
          %v697 = vld [vmem:[%s280 + $0x3c8] sm:$0xff]
          %v698 = vld [vmem:[%s280 + $0x3d0] sm:$0xff]
          %v699 = vld [vmem:[%s280 + $0x3d8] sm:$0xff]
          %v700 = vld [vmem:[%s280 + $0x3e0] sm:$0xff]
          %v701 = vld [vmem:[%s280 + $0x3e8] sm:$0xff]
          %v702 = vld [vmem:[%s280 + $0x3f0] sm:$0xff]
          %v703 = vld [vmem:[%s280 + $0x3f8] sm:$0xff]
          %v704 = vld [vmem:[%s280 + $0x400] sm:$0xff]
          %v705 = vld [vmem:[%s280 + $0x408] sm:$0xff]
          %v706 = vld [vmem:[%s280 + $0x410] sm:$0xff]
          %v707 = vld [vmem:[%s280 + $0x418] sm:$0xff]
          %v708 = vld [vmem:[%s280 + $0x420] sm:$0xff]
          %v709 = vld [vmem:[%s280 + $0x428] sm:$0xff]
          %v710 = vld [vmem:[%s280 + $0x430] sm:$0xff]
          %v711 = vld [vmem:[%s280 + $0x438] sm:$0xff]
          %v712 = vld [vmem:[%s280 + $0x440] sm:$0xff]
          %v713 = vld [vmem:[%s280 + $0x448] sm:$0xff]
          %v714 = vld [vmem:[%s280 + $0x450] sm:$0xff]
          %v715 = vld [vmem:[%s280 + $0x458] sm:$0xff]
          %v716 = vld [vmem:[%s280 + $0x460] sm:$0xff]
          %v717 = vld [vmem:[%s280 + $0x468] sm:$0xff]
          %v718 = vld [vmem:[%s280 + $0x470] sm:$0xff]
          %v719 = vld [vmem:[%s280 + $0x478] sm:$0xff]
          %v720 = vld [vmem:[%s280 + $0x480] sm:$0xff]
          %v721 = vld [vmem:[%s280 + $0x488] sm:$0xff]
          %v722 = vld [vmem:[%s280 + $0x490] sm:$0xff]
          %v723 = vld [vmem:[%s280 + $0x498] sm:$0xff]
          %v724 = vld [vmem:[%s280 + $0x4a0] sm:$0xff]
          %v725 = vld [vmem:[%s280 + $0x4a8] sm:$0xff]
          %v726 = vld [vmem:[%s280 + $0x4b0] sm:$0xff]
          %v727 = vld [vmem:[%s280 + $0x4b8] sm:$0xff]
          %v728 = vld [vmem:[%s280 + $0x4c0] sm:$0xff]
          %v729 = vld [vmem:[%s280 + $0x4c8] sm:$0xff]
          %v730 = vld [vmem:[%s280 + $0x4d0] sm:$0xff]
          %v731 = vld [vmem:[%s280 + $0x4d8] sm:$0xff]
          %v732 = vld [vmem:[%s280 + $0x4e0] sm:$0xff]
          %v733 = vld [vmem:[%s280 + $0x4e8] sm:$0xff]
          %v734 = vld [vmem:[%s280 + $0x4f0] sm:$0xff]
          %v735 = vld [vmem:[%s280 + $0x4f8] sm:$0xff]
          %v736 = vld [vmem:[%s280 + $0x500] sm:$0xff]
          %v737 = vld [vmem:[%s280 + $0x508] sm:$0xff]
          %v738 = vld [vmem:[%s280 + $0x510] sm:$0xff]
          %v739 = vld [vmem:[%s280 + $0x518] sm:$0xff]
          %v740 = vld [vmem:[%s280 + $0x520] sm:$0xff]
          %v741 = vld [vmem:[%s280 + $0x528] sm:$0xff]
          %v742 = vld [vmem:[%s280 + $0x530] sm:$0xff]
          %v743 = vld [vmem:[%s280 + $0x538] sm:$0xff]
          %v744 = vld [vmem:[%s280 + $0x540] sm:$0xff]
          %v745 = vld [vmem:[%s280 + $0x548] sm:$0xff]
          %v746 = vld [vmem:[%s280 + $0x550] sm:$0xff]
          %v747 = vld [vmem:[%s280 + $0x558] sm:$0xff]
          %v748 = vld [vmem:[%s280 + $0x560] sm:$0xff]
          %v749 = vld [vmem:[%s280 + $0x568] sm:$0xff]
          %v750 = vld [vmem:[%s280 + $0x570] sm:$0xff]
          %v751 = vld [vmem:[%s280 + $0x578] sm:$0xff]
          %v752 = vld [vmem:[%s280 + $0x580] sm:$0xff]
          %v753 = vld [vmem:[%s280 + $0x588] sm:$0xff]
          %v754 = vld [vmem:[%s280 + $0x590] sm:$0xff]
          %v755 = vld [vmem:[%s280 + $0x598] sm:$0xff]
          %v756 = vld [vmem:[%s280 + $0x5a0] sm:$0xff]
          %v757 = vld [vmem:[%s280 + $0x5a8] sm:$0xff]
          %v758 = vld [vmem:[%s280 + $0x5b0] sm:$0xff]
          %v759 = vld [vmem:[%s280 + $0x5b8] sm:$0xff]
          %v760 = vld [vmem:[%s280 + $0x5c0] sm:$0xff]
          %v761 = vld [vmem:[%s280 + $0x5c8] sm:$0xff]
          %v762 = vld [vmem:[%s280 + $0x5d0] sm:$0xff]
          %v763 = vld [vmem:[%s280 + $0x5d8] sm:$0xff]
          %v764 = vld [vmem:[%s280 + $0x5e0] sm:$0xff]
          %v765 = vld [vmem:[%s280 + $0x5e8] sm:$0xff]
          %v766 = vld [vmem:[%s280 + $0x5f0] sm:$0xff]
          %v767 = vld [vmem:[%s280 + $0x5f8] sm:$0xff]
          %v768 = vld [vmem:[%s280 + $0x600] sm:$0xff]
          %v769 = vld [vmem:[%s280 + $0x608] sm:$0xff]
          %v770 = vld [vmem:[%s280 + $0x610] sm:$0xff]
          %v771 = vld [vmem:[%s280 + $0x618] sm:$0xff]
          %v772 = vld [vmem:[%s280 + $0x620] sm:$0xff]
          %v773 = vld [vmem:[%s280 + $0x628] sm:$0xff]
          %v774 = vld [vmem:[%s280 + $0x630] sm:$0xff]
          %v775 = vld [vmem:[%s280 + $0x638] sm:$0xff]
          %v776 = vld [vmem:[%s280 + $0x640] sm:$0xff]
          %v777 = vld [vmem:[%s280 + $0x648] sm:$0xff]
          %v778 = vld [vmem:[%s280 + $0x650] sm:$0xff]
          %v779 = vld [vmem:[%s280 + $0x658] sm:$0xff]
          %v780 = vld [vmem:[%s280 + $0x660] sm:$0xff]
          %v781 = vld [vmem:[%s280 + $0x668] sm:$0xff]
          %v782 = vld [vmem:[%s280 + $0x670] sm:$0xff]
          %v783 = vld [vmem:[%s280 + $0x678] sm:$0xff]
          %v784 = vld [vmem:[%s280 + $0x680] sm:$0xff]
          %v785 = vld [vmem:[%s280 + $0x688] sm:$0xff]
          %v786 = vld [vmem:[%s280 + $0x690] sm:$0xff]
          %v787 = vld [vmem:[%s280 + $0x698] sm:$0xff]
          %v788 = vld [vmem:[%s280 + $0x6a0] sm:$0xff]
          %v789 = vld [vmem:[%s280 + $0x6a8] sm:$0xff]
          %v790 = vld [vmem:[%s280 + $0x6b0] sm:$0xff]
          %v791 = vld [vmem:[%s280 + $0x6b8] sm:$0xff]
          %v792 = vld [vmem:[%s280 + $0x6c0] sm:$0xff]
          %v793 = vld [vmem:[%s280 + $0x6c8] sm:$0xff]
          %v794 = vld [vmem:[%s280 + $0x6d0] sm:$0xff]
          %v795 = vld [vmem:[%s280 + $0x6d8] sm:$0xff]
          %v796 = vld [vmem:[%s280 + $0x6e0] sm:$0xff]
          %v797 = vld [vmem:[%s280 + $0x6e8] sm:$0xff]
          %v798 = vld [vmem:[%s280 + $0x6f0] sm:$0xff]
          %v799 = vld [vmem:[%s280 + $0x6f8] sm:$0xff]
          %v800 = vld [vmem:[%s280 + $0x700] sm:$0xff]
          %v801 = vld [vmem:[%s280 + $0x708] sm:$0xff]
          %v802 = vld [vmem:[%s280 + $0x710] sm:$0xff]
          %v803 = vld [vmem:[%s280 + $0x718] sm:$0xff]
          %v804 = vld [vmem:[%s280 + $0x720] sm:$0xff]
          %v805 = vld [vmem:[%s280 + $0x728] sm:$0xff]
          %v806 = vld [vmem:[%s280 + $0x730] sm:$0xff]
          %v807 = vld [vmem:[%s280 + $0x738] sm:$0xff]
          %v808 = vld [vmem:[%s280 + $0x740] sm:$0xff]
          %v809 = vld [vmem:[%s280 + $0x748] sm:$0xff]
          %v810 = vld [vmem:[%s280 + $0x750] sm:$0xff]
          %v811 = vld [vmem:[%s280 + $0x758] sm:$0xff]
          %v812 = vld [vmem:[%s280 + $0x760] sm:$0xff]
          %v813 = vld [vmem:[%s280 + $0x768] sm:$0xff]
          %v814 = vld [vmem:[%s280 + $0x770] sm:$0xff]
          %v815 = vld [vmem:[%s280 + $0x778] sm:$0xff]
          %v816 = vld [vmem:[%s280 + $0x780] sm:$0xff]
          %v817 = vld [vmem:[%s280 + $0x788] sm:$0xff]
          %v818 = vld [vmem:[%s280 + $0x790] sm:$0xff]
          %v819 = vld [vmem:[%s280 + $0x798] sm:$0xff]
          %v820 = vld [vmem:[%s280 + $0x7a0] sm:$0xff]
          %v821 = vld [vmem:[%s280 + $0x7a8] sm:$0xff]
          %v822 = vld [vmem:[%s280 + $0x7b0] sm:$0xff]
          %v823 = vld [vmem:[%s280 + $0x7b8] sm:$0xff]
          %v824 = vld [vmem:[%s280 + $0x7c0] sm:$0xff]
          %v825 = vld [vmem:[%s280 + $0x7c8] sm:$0xff]
          %v826 = vld [vmem:[%s280 + $0x7d0] sm:$0xff]
          %v827 = vld [vmem:[%s280 + $0x7d8] sm:$0xff]
          %v828 = vld [vmem:[%s280 + $0x7e0] sm:$0xff]
          %v829 = vld [vmem:[%s280 + $0x7e8] sm:$0xff]
          %v830 = vld [vmem:[%s280 + $0x7f0] sm:$0xff]
          %v831 = vld [vmem:[%s280 + $0x7f8] sm:$0xff]
          %833 = vst [vmem:[#allocation1] ss:$4 sm:$0xff] %v575
          %v834 = vld.sshfl [vmem:[#allocation1] sm:$0xff pattern:$0x73625140]
          %v835 = vld.sshfl [vmem:[#allocation1 + $0x8] sm:$0xff pattern:$0x73625140]
          %v836 = vld.sshfl [vmem:[#allocation1 + $0x10] sm:$0xff pattern:$0x73625140]
          %v837 = vld.sshfl [vmem:[#allocation1 + $0x18] sm:$0xff pattern:$0x73625140]
          %842 = vmatpush.msra.mxu0 %v636
          %843 = vmatpush.msra.mxu0 %v632
          %844 = vmatpush.msra.mxu0 %v628
          %845 = vmatpush.msra.mxu0 %v624
          %846 = vmatpush.msra.mxu0 %v620
          %847 = vmatpush.msra.mxu0 %v616
          %848 = vmatpush.msra.mxu0 %v612
          %849 = vmatpush.msra.mxu0 %v608
          %850 = vmatpush.msra.mxu0 %v604
          %851 = vmatpush.msra.mxu0 %v600
          %852 = vmatpush.msra.mxu0 %v596
          %853 = vmatpush.msra.mxu0 %v592
          %854 = vmatpush.msra.mxu0 %v588
          %855 = vmatpush.msra.mxu0 %v584
          %856 = vmatpush.msra.mxu0 %v580
          %857 = vmatpush.msra.mxu0 %v576
          %858 = vmatmul.f32.gmra.mxu0 %v834
          %v859 = vpop.f32.mrf.mxu0
          %v860 = vadd.f32 0.0, %v859
          %861 = vdwg.mxu0
          %862 = vmatpush.msra.mxu0 %v700
          %863 = vmatpush.msra.mxu0 %v696
          %864 = vmatpush.msra.mxu0 %v692
          %865 = vmatpush.msra.mxu0 %v688
          %866 = vmatpush.msra.mxu0 %v684
          %867 = vmatpush.msra.mxu0 %v680
          %868 = vmatpush.msra.mxu0 %v676
          %869 = vmatpush.msra.mxu0 %v672
          %870 = vmatpush.msra.mxu0 %v668
          %871 = vmatpush.msra.mxu0 %v664
          %872 = vmatpush.msra.mxu0 %v660
          %873 = vmatpush.msra.mxu0 %v656
          %874 = vmatpush.msra.mxu0 %v652
          %875 = vmatpush.msra.mxu0 %v648
          %876 = vmatpush.msra.mxu0 %v644
          %877 = vmatpush.msra.mxu0 %v640
          %878 = vmatmul.f32.gmra.mxu0 %v835
          %v879 = vpop.f32.mrf.mxu0
          %v880 = vadd.f32 %v860, %v879
          %881 = vdwg.mxu0
          %882 = vmatpush.msra.mxu0 %v764
          %883 = vmatpush.msra.mxu0 %v760
          %884 = vmatpush.msra.mxu0 %v756
          %885 = vmatpush.msra.mxu0 %v752
          %886 = vmatpush.msra.mxu0 %v748
          %887 = vmatpush.msra.mxu0 %v744
          %888 = vmatpush.msra.mxu0 %v740
          %889 = vmatpush.msra.mxu0 %v736
          %890 = vmatpush.msra.mxu0 %v732
          %891 = vmatpush.msra.mxu0 %v728
          %892 = vmatpush.msra.mxu0 %v724
          %893 = vmatpush.msra.mxu0 %v720
          %894 = vmatpush.msra.mxu0 %v716
          %895 = vmatpush.msra.mxu0 %v712
          %896 = vmatpush.msra.mxu0 %v708
          %897 = vmatpush.msra.mxu0 %v704
          %898 = vmatmul.f32.gmra.mxu0 %v836
          %v899 = vpop.f32.mrf.mxu0
          %v900 = vadd.f32 %v880, %v899
          %901 = vdwg.mxu0
          %902 = vmatpush.msra.mxu0 %v828
          %903 = vmatpush.msra.mxu0 %v824
          %904 = vmatpush.msra.mxu0 %v820
          %905 = vmatpush.msra.mxu0 %v816
          %906 = vmatpush.msra.mxu0 %v812
          %907 = vmatpush.msra.mxu0 %v808
          %908 = vmatpush.msra.mxu0 %v804
          %909 = vmatpush.msra.mxu0 %v800
          %910 = vmatpush.msra.mxu0 %v796
          %911 = vmatpush.msra.mxu0 %v792
          %912 = vmatpush.msra.mxu0 %v788
          %913 = vmatpush.msra.mxu0 %v784
          %914 = vmatpush.msra.mxu0 %v780
          %915 = vmatpush.msra.mxu0 %v776
          %916 = vmatpush.msra.mxu0 %v772
          %917 = vmatpush.msra.mxu0 %v768
          %918 = vmatmul.f32.gmra.mxu0 %v837
          %v919 = vpop.f32.mrf.mxu0
          %v920 = vadd.f32 %v900, %v919
          %921 = vdwg.mxu0
          %922 = vmatpush.msra.mxu0 %v637
          %923 = vmatpush.msra.mxu0 %v633
          %924 = vmatpush.msra.mxu0 %v629
          %925 = vmatpush.msra.mxu0 %v625
          %926 = vmatpush.msra.mxu0 %v621
          %927 = vmatpush.msra.mxu0 %v617
          %928 = vmatpush.msra.mxu0 %v613
          %929 = vmatpush.msra.mxu0 %v609
          %930 = vmatpush.msra.mxu0 %v605
          %931 = vmatpush.msra.mxu0 %v601
          %932 = vmatpush.msra.mxu0 %v597
          %933 = vmatpush.msra.mxu0 %v593
          %934 = vmatpush.msra.mxu0 %v589
          %935 = vmatpush.msra.mxu0 %v585
          %936 = vmatpush.msra.mxu0 %v581
          %937 = vmatpush.msra.mxu0 %v577
          %938 = vmatmul.f32.gmra.mxu0 %v834
          %v939 = vpop.f32.mrf.mxu0
          %v940 = vadd.f32 0.0, %v939
          %941 = vdwg.mxu0
          %942 = vmatpush.msra.mxu0 %v701
          %943 = vmatpush.msra.mxu0 %v697
          %944 = vmatpush.msra.mxu0 %v693
          %945 = vmatpush.msra.mxu0 %v689
          %946 = vmatpush.msra.mxu0 %v685
          %947 = vmatpush.msra.mxu0 %v681
          %948 = vmatpush.msra.mxu0 %v677
          %949 = vmatpush.msra.mxu0 %v673
          %950 = vmatpush.msra.mxu0 %v669
          %951 = vmatpush.msra.mxu0 %v665
          %952 = vmatpush.msra.mxu0 %v661
          %953 = vmatpush.msra.mxu0 %v657
          %954 = vmatpush.msra.mxu0 %v653
          %955 = vmatpush.msra.mxu0 %v649
          %956 = vmatpush.msra.mxu0 %v645
          %957 = vmatpush.msra.mxu0 %v641
          %958 = vmatmul.f32.gmra.mxu0 %v835
          %v959 = vpop.f32.mrf.mxu0
          %v960 = vadd.f32 %v940, %v959
          %961 = vdwg.mxu0
          %962 = vmatpush.msra.mxu0 %v765
          %963 = vmatpush.msra.mxu0 %v761
          %964 = vmatpush.msra.mxu0 %v757
          %965 = vmatpush.msra.mxu0 %v753
          %966 = vmatpush.msra.mxu0 %v749
          %967 = vmatpush.msra.mxu0 %v745
          %968 = vmatpush.msra.mxu0 %v741
          %969 = vmatpush.msra.mxu0 %v737
          %970 = vmatpush.msra.mxu0 %v733
          %971 = vmatpush.msra.mxu0 %v729
          %972 = vmatpush.msra.mxu0 %v725
          %973 = vmatpush.msra.mxu0 %v721
          %974 = vmatpush.msra.mxu0 %v717
          %975 = vmatpush.msra.mxu0 %v713
          %976 = vmatpush.msra.mxu0 %v709
          %977 = vmatpush.msra.mxu0 %v705
          %978 = vmatmul.f32.gmra.mxu0 %v836
          %v979 = vpop.f32.mrf.mxu0
          %v980 = vadd.f32 %v960, %v979
          %981 = vdwg.mxu0
          %982 = vmatpush.msra.mxu0 %v829
          %983 = vmatpush.msra.mxu0 %v825
          %984 = vmatpush.msra.mxu0 %v821
          %985 = vmatpush.msra.mxu0 %v817
          %986 = vmatpush.msra.mxu0 %v813
          %987 = vmatpush.msra.mxu0 %v809
          %988 = vmatpush.msra.mxu0 %v805
          %989 = vmatpush.msra.mxu0 %v801
          %990 = vmatpush.msra.mxu0 %v797
          %991 = vmatpush.msra.mxu0 %v793
          %992 = vmatpush.msra.mxu0 %v789
          %993 = vmatpush.msra.mxu0 %v785
          %994 = vmatpush.msra.mxu0 %v781
          %995 = vmatpush.msra.mxu0 %v777
          %996 = vmatpush.msra.mxu0 %v773
          %997 = vmatpush.msra.mxu0 %v769
          %998 = vmatmul.f32.gmra.mxu0 %v837
          %v999 = vpop.f32.mrf.mxu0
          %v1000 = vadd.f32 %v980, %v999
          %1001 = vdwg.mxu0
          %1002 = vmatpush.msra.mxu0 %v638
          %1003 = vmatpush.msra.mxu0 %v634
          %1004 = vmatpush.msra.mxu0 %v630
          %1005 = vmatpush.msra.mxu0 %v626
          %1006 = vmatpush.msra.mxu0 %v622
          %1007 = vmatpush.msra.mxu0 %v618
          %1008 = vmatpush.msra.mxu0 %v614
          %1009 = vmatpush.msra.mxu0 %v610
          %1010 = vmatpush.msra.mxu0 %v606
          %1011 = vmatpush.msra.mxu0 %v602
          %1012 = vmatpush.msra.mxu0 %v598
          %1013 = vmatpush.msra.mxu0 %v594
          %1014 = vmatpush.msra.mxu0 %v590
          %1015 = vmatpush.msra.mxu0 %v586
          %1016 = vmatpush.msra.mxu0 %v582
          %1017 = vmatpush.msra.mxu0 %v578
          %1018 = vmatmul.f32.gmra.mxu0 %v834
          %v1019 = vpop.f32.mrf.mxu0
          %v1020 = vadd.f32 0.0, %v1019
          %1021 = vdwg.mxu0
          %1022 = vmatpush.msra.mxu0 %v702
          %1023 = vmatpush.msra.mxu0 %v698
          %1024 = vmatpush.msra.mxu0 %v694
          %1025 = vmatpush.msra.mxu0 %v690
          %1026 = vmatpush.msra.mxu0 %v686
          %1027 = vmatpush.msra.mxu0 %v682
          %1028 = vmatpush.msra.mxu0 %v678
          %1029 = vmatpush.msra.mxu0 %v674
          %1030 = vmatpush.msra.mxu0 %v670
          %1031 = vmatpush.msra.mxu0 %v666
          %1032 = vmatpush.msra.mxu0 %v662
          %1033 = vmatpush.msra.mxu0 %v658
          %1034 = vmatpush.msra.mxu0 %v654
          %1035 = vmatpush.msra.mxu0 %v650
          %1036 = vmatpush.msra.mxu0 %v646
          %1037 = vmatpush.msra.mxu0 %v642
          %1038 = vmatmul.f32.gmra.mxu0 %v835
          %v1039 = vpop.f32.mrf.mxu0
          %v1040 = vadd.f32 %v1020, %v1039
          %1041 = vdwg.mxu0
          %1042 = vmatpush.msra.mxu0 %v766
          %1043 = vmatpush.msra.mxu0 %v762
          %1044 = vmatpush.msra.mxu0 %v758
          %1045 = vmatpush.msra.mxu0 %v754
          %1046 = vmatpush.msra.mxu0 %v750
          %1047 = vmatpush.msra.mxu0 %v746
          %1048 = vmatpush.msra.mxu0 %v742
          %1049 = vmatpush.msra.mxu0 %v738
          %1050 = vmatpush.msra.mxu0 %v734
          %1051 = vmatpush.msra.mxu0 %v730
          %1052 = vmatpush.msra.mxu0 %v726
          %1053 = vmatpush.msra.mxu0 %v722
          %1054 = vmatpush.msra.mxu0 %v718
          %1055 = vmatpush.msra.mxu0 %v714
          %1056 = vmatpush.msra.mxu0 %v710
          %1057 = vmatpush.msra.mxu0 %v706
          %1058 = vmatmul.f32.gmra.mxu0 %v836
          %v1059 = vpop.f32.mrf.mxu0
          %v1060 = vadd.f32 %v1040, %v1059
          %1061 = vdwg.mxu0
          %1062 = vmatpush.msra.mxu0 %v830
          %1063 = vmatpush.msra.mxu0 %v826
          %1064 = vmatpush.msra.mxu0 %v822
          %1065 = vmatpush.msra.mxu0 %v818
          %1066 = vmatpush.msra.mxu0 %v814
          %1067 = vmatpush.msra.mxu0 %v810
          %1068 = vmatpush.msra.mxu0 %v806
          %1069 = vmatpush.msra.mxu0 %v802
          %1070 = vmatpush.msra.mxu0 %v798
          %1071 = vmatpush.msra.mxu0 %v794
          %1072 = vmatpush.msra.mxu0 %v790
          %1073 = vmatpush.msra.mxu0 %v786
          %1074 = vmatpush.msra.mxu0 %v782
          %1075 = vmatpush.msra.mxu0 %v778
          %1076 = vmatpush.msra.mxu0 %v774
          %1077 = vmatpush.msra.mxu0 %v770
          %1078 = vmatmul.f32.gmra.mxu0 %v837
          %v1079 = vpop.f32.mrf.mxu0
          %v1080 = vadd.f32 %v1060, %v1079
          %1081 = vdwg.mxu0
          %1082 = vmatpush.msra.mxu0 %v639
          %1083 = vmatpush.msra.mxu0 %v635
          %1084 = vmatpush.msra.mxu0 %v631
          %1085 = vmatpush.msra.mxu0 %v627
          %1086 = vmatpush.msra.mxu0 %v623
          %1087 = vmatpush.msra.mxu0 %v619
          %1088 = vmatpush.msra.mxu0 %v615
          %1089 = vmatpush.msra.mxu0 %v611
          %1090 = vmatpush.msra.mxu0 %v607
          %1091 = vmatpush.msra.mxu0 %v603
          %1092 = vmatpush.msra.mxu0 %v599
          %1093 = vmatpush.msra.mxu0 %v595
          %1094 = vmatpush.msra.mxu0 %v591
          %1095 = vmatpush.msra.mxu0 %v587
          %1096 = vmatpush.msra.mxu0 %v583
          %1097 = vmatpush.msra.mxu0 %v579
          %1098 = vmatmul.f32.gmra.mxu0 %v834
          %v1099 = vpop.f32.mrf.mxu0
          %v1100 = vadd.f32 0.0, %v1099
          %1101 = vdwg.mxu0
          %1102 = vmatpush.msra.mxu0 %v703
          %1103 = vmatpush.msra.mxu0 %v699
          %1104 = vmatpush.msra.mxu0 %v695
          %1105 = vmatpush.msra.mxu0 %v691
          %1106 = vmatpush.msra.mxu0 %v687
          %1107 = vmatpush.msra.mxu0 %v683
          %1108 = vmatpush.msra.mxu0 %v679
          %1109 = vmatpush.msra.mxu0 %v675
          %1110 = vmatpush.msra.mxu0 %v671
          %1111 = vmatpush.msra.mxu0 %v667
          %1112 = vmatpush.msra.mxu0 %v663
          %1113 = vmatpush.msra.mxu0 %v659
          %1114 = vmatpush.msra.mxu0 %v655
          %1115 = vmatpush.msra.mxu0 %v651
          %1116 = vmatpush.msra.mxu0 %v647
          %1117 = vmatpush.msra.mxu0 %v643
          %1118 = vmatmul.f32.gmra.mxu0 %v835
          %v1119 = vpop.f32.mrf.mxu0
          %v1120 = vadd.f32 %v1100, %v1119
          %1121 = vdwg.mxu0
          %1122 = vmatpush.msra.mxu0 %v767
          %1123 = vmatpush.msra.mxu0 %v763
          %1124 = vmatpush.msra.mxu0 %v759
          %1125 = vmatpush.msra.mxu0 %v755
          %1126 = vmatpush.msra.mxu0 %v751
          %1127 = vmatpush.msra.mxu0 %v747
          %1128 = vmatpush.msra.mxu0 %v743
          %1129 = vmatpush.msra.mxu0 %v739
          %1130 = vmatpush.msra.mxu0 %v735
          %1131 = vmatpush.msra.mxu0 %v731
          %1132 = vmatpush.msra.mxu0 %v727
          %1133 = vmatpush.msra.mxu0 %v723
          %1134 = vmatpush.msra.mxu0 %v719
          %1135 = vmatpush.msra.mxu0 %v715
          %1136 = vmatpush.msra.mxu0 %v711
          %1137 = vmatpush.msra.mxu0 %v707
          %1138 = vmatmul.f32.gmra.mxu0 %v836
          %v1139 = vpop.f32.mrf.mxu0
          %v1140 = vadd.f32 %v1120, %v1139
          %1141 = vdwg.mxu0
          %1142 = vmatpush.msra.mxu0 %v831
          %1143 = vmatpush.msra.mxu0 %v827
          %1144 = vmatpush.msra.mxu0 %v823
          %1145 = vmatpush.msra.mxu0 %v819
          %1146 = vmatpush.msra.mxu0 %v815
          %1147 = vmatpush.msra.mxu0 %v811
          %1148 = vmatpush.msra.mxu0 %v807
          %1149 = vmatpush.msra.mxu0 %v803
          %1150 = vmatpush.msra.mxu0 %v799
          %1151 = vmatpush.msra.mxu0 %v795
          %1152 = vmatpush.msra.mxu0 %v791
          %1153 = vmatpush.msra.mxu0 %v787
          %1154 = vmatpush.msra.mxu0 %v783
          %1155 = vmatpush.msra.mxu0 %v779
          %1156 = vmatpush.msra.mxu0 %v775
          %1157 = vmatpush.msra.mxu0 %v771
          %1158 = vmatmul.f32.gmra.mxu0 %v837
          %v1159 = vpop.f32.mrf.mxu0
          %v1160 = vadd.f32 %v1140, %v1159
          %1161 = vdwg.mxu0
          %v1166 = vrot.slane %v1000, 6
          %v1167 = vrot.slane %v1080, 4
          %v1168 = vrot.slane %v1160, 2
          %v1169 = vsel %vm541, %v920, %v1166
          %v1170 = vsel %vm543, %v1167, %v1168
          %v1171 = vsel %vm545, %v1169, %v1170
          %v1173 = vadd.f32 %v574, %v1171
          %1174 = vst [vmem:[#allocation3] sm:$0xff] %v1173
          %p1175 = scmp.eq.s32.totalorder %s28, 2
          // Predicated region
          $region65: #{iqa_merge_net_forward.1} parent=59 // pred_check
            %p1176 = pneg %p1175
          $region66: #{iqa_merge_net_forward.1} parent=59 // pred_check_branch
            %1178 = sbr.rel (%p1176) target = $region68
          $region67: #{iqa_merge_net_forward.1} parent=59 // pred_region
            %v1179 = vld [vmem:[#allocation3] sm:$0xff]
            %v1180 = vld [vmem:[#allocation7] sm:$0xf]
            %v1182 = vperm.slane %v1180, 0
            %v1183 = vperm.slane %v1180, 1
            %v1184 = vperm.slane %v1180, 2
            %v1185 = vperm.slane %v1180, 3
            %v1186 = vrot.slane %v1183, 6
            %v1187 = vrot.slane %v1184, 4
            %v1188 = vrot.slane %v1185, 2
            %v1189 = vsel %vm541, %v1182, %v1186
            %v1190 = vsel %vm543, %v1187, %v1188
            %v1191 = vsel %vm545, %v1189, %v1190
            %v1193 = vadd.f32 %v1179, %v1191
            %v1194 = vmax.f32 %v1193, 0.0
            %v1195 = vld [vmem:[#allocation9] sm:$0xf]
            %v1197 = vperm.slane %v1195, 0
            %v1198 = vperm.slane %v1195, 1
            %v1199 = vperm.slane %v1195, 2
            %v1200 = vperm.slane %v1195, 3
            %v1201 = vrot.slane %v1198, 6
            %v1202 = vrot.slane %v1199, 4
            %v1203 = vrot.slane %v1200, 2
            %v1204 = vsel %vm541, %v1197, %v1201
            %v1205 = vsel %vm543, %v1202, %v1203
            %v1206 = vsel %vm545, %v1204, %v1205
            %v1208 = vmul.f32 %v1194, %v1206
            %1210 = vst [vmem:[#allocation1] ss:$4 sm:$0xff] %v1208
            %v1211 = vld.sshfl [vmem:[#allocation1] sm:$0xff pattern:$0x73625140]
            %v1212 = vld.sshfl [vmem:[#allocation1 + $0x8] sm:$0xff pattern:$0x73625140]
            %v1213 = vld.sshfl [vmem:[#allocation1 + $0x10] sm:$0xff pattern:$0x73625140]
            %v1214 = vld.sshfl [vmem:[#allocation1 + $0x18] sm:$0xff pattern:$0x73625140]
            %v1219 = vsel %vm541, %v1211, 0.0
            %v1220 = vsel %vm541, %v1212, 0.0
            %v1221 = vadd.f32 %v1219, %v1220
            %v1222 = vsel %vm541, %v1213, 0.0
            %v1223 = vadd.f32 %v1221, %v1222
            %v1224 = vsel %vm541, %v1214, 0.0
            %v1225 = vadd.f32 %v1223, %v1224
            %1226 = vadd.xlane.f32.xlu0 %v1225
            %v1227 = vpop.xlane.xlu0 %1226
            %v1228 = vld [vmem:[#allocation4] sm:$0x1]
            %v1230 = vperm.slane %v1228, 0
            %v1232 = vadd.f32 %v1227, %v1230
            %v1233 = vxor.u32 %v1232, 2147483648
            %v1234 = vmul.f32 %v1233, 1.442695
            %v1235 = vpow.pop %v1234
            %v1236 = vadd.f32 %v1235, 1.0
            %v1237 = vrcp.pop %v1236
            %v1238 = vmul.f32 %v1236, %v1237
            %v1239 = vsub.f32 1.0, %v1238
            %v1240 = vmul.f32 %v1237, %v1239
            %v1241 = vadd.f32 %v1237, %v1240
            %vm1242 = vweird.f32 %v1236
            %vm1243 = vweird.f32 %v1237
            %vm1244 = vmor %vm1242, %vm1243
            %v1245 = vsel %vm1244, %v1237, %v1241
            %v1246 = vand.u32 2147483647, %v1236
            %vm1247 = vcmp.eq.f32.partialorder %v1246, 8.507059e+37
            %v1248 = vand.u32 %v1236, 2147483648
            %v1249 = vor.u32 1.1754944e-38, %v1248
            %v1250 = vsel %vm1247, %v1249, %v1245
            %v1251 = vmul.f32 1.0, %v1250
            %1253 = vset.pattern.permute.xlu0 0
            %1254 = vperm.xlu0 %1253, %v1251
            %v1255 = vpop.permute.xlu0 %1254
            %1257 = vst [vmem:[%s352] sm:$0x3] %v1255
          $region68: #{iqa_merge_net_forward.1} parent=59 // pred_fallthru
            _
        $region60: #{iqa_merge_net_forward.1} parent=39 // pred_fallthru
          _
        %p1258 = scmp.lt.s32.totalorder %s27, 0
        %s1259 = scalar_select %p1258, %s27, 0
        %s1260 = smul.addr %s1259, 2
        %s1261 = scalar_lea.vmem %s5, %s1260
        // Predicated region
        $region69: #{iqa_merge_net_forward.1} parent=39 // pred_check
          %p1262 = pneg %p178
        $region70: #{iqa_merge_net_forward.1} parent=39 // pred_check_branch
          %1264 = sbr.rel (%p1262) target = $region72
        $region71: #{iqa_merge_net_forward.1} parent=39 // pred_region
          _
        $region72: #{iqa_merge_net_forward.1} parent=39 // pred_fallthru
          _
        // Predicated region
        $region73: #{iqa_merge_net_forward.1} parent=39 // pred_check
          %p1265 = pneg %p178
        $region74: #{iqa_merge_net_forward.1} parent=39 // pred_check_branch
          %1267 = sbr.rel (%p1265) target = $region76
        $region75: #{iqa_merge_net_forward.1} parent=39 // pred_region
          %p1268 = scmp.lt.s32.totalorder %s27, 0
          %s1269 = scalar_select %p1268, %s27, 0
          %s1270 = smul.addr %s1269, 2
          %s1271 = scalar_lea.vmem %s5, %s1270
        $region76: #{iqa_merge_net_forward.1} parent=39 // pred_fallthru
          _
      $region40: #{iqa_merge_net_forward.1} parent=5 // pred_fallthru
        _
      %p1272 = scmp.le.s32.totalorder 2, %s17
      // Predicated region
      $region77: #{iqa_merge_net_forward.1} parent=5 // pred_check
        %p1273 = pneg %p1272
      $region78: #{iqa_merge_net_forward.1} parent=5 // pred_check_branch
        %1275 = sbr.rel (%p1273) target = $region80
      $region79: #{iqa_merge_net_forward.1} parent=5 // pred_region
        %s1276 = ssub.s32 %s17, 2
      $region80: #{iqa_merge_net_forward.1} parent=5 // pred_fallthru
        _
    $region6: #{iqa_merge_net_forward.1} parent=1 // loop_footer
      %s21 = sadd.s32 1, %s17
    $region7: #{iqa_merge_net_forward.1} parent=1 // loop_footer_branch
      %16 = sbr.rel target = $region3
    $region8: #{iqa_merge_net_forward.1} parent=1 // loop_exit
      _
    %1277 = vsyncpa [#allocation6], 1
    %s1278 = scalar_lea.sflag [#allocation6], 1
    %1279 = vsyncpa %s1278, 1
    %1280 = vsyncpa [#allocation8], 1

</llo_original>
